<compile_context>
chip_gen: v7x
topology: tpu7x:2x2x1
jax: 0.10.0
libtpu: 0.0.40
codegen_flags: <defaults>
</compile_context>

<pallas_src>
import functools

import jax
import jax.numpy as jnp
from jax.experimental import pallas as pl
from jax.experimental.pallas import tpu as pltpu


def _round_up(a, b):
    return (a + b - 1) // b * b


def _pick_i_tile(I, target):
    """Largest multiple of 128 <= target that divides I (falls back to I)."""
    t = min(target, I)
    t -= t % 128
    while t >= 128:
        if I % t == 0:
            return t
        t -= 128
    return I


# ---------------------------------------------------------------------------
# Kernel body
# ---------------------------------------------------------------------------
def meanw_deltauv_kernel(
    x_ref,      # (tT, H)       bf16
    w13_ref,    # (H, 2*tI)     bf16   [w1 tile | w3 tile] interleaved per I-tile
    v13_ref,    # (H, 2*r)      bf16   [v1 | v3]
    u1_ref,     # (r, tI)       bf16
    u3_ref,     # (r, tI)       bf16
    w2_ref,     # (tI, H)       bf16
    v2_ref,     # (tI, r)       bf16
    u2_ref,     # (r, H)        bf16
    o_ref,      # (tT, H)       bf16
    acc_ref,    # (tT, H)       f32   scratch: down-proj accumulator
    hv2_ref,    # (tT, r)       f32   scratch: h @ v2 accumulator
    xv_ref,     # (tT, 2*r)     bf16  scratch: x @ [v1|v3] cache
):
    i = pl.program_id(1)
    n_i = pl.num_programs(1)
    r, tI = u1_ref.shape

    @pl.when(i == 0)
    def _init():
        acc_ref[...] = jnp.zeros_like(acc_ref)
        hv2_ref[...] = jnp.zeros_like(hv2_ref)
        # Low-rank input projection only depends on x -> compute once per T-tile.
        xv_ref[...] = jnp.dot(
            x_ref[...], v13_ref[...], preferred_element_type=jnp.float32
        ).astype(jnp.bfloat16)

    x = x_ref[...]                                               # (tT, H) bf16

    # Fused gate/up mean matmul: one MXU pass, x read once per I-tile.
    gu = jnp.dot(x, w13_ref[...], preferred_element_type=jnp.float32)  # (tT, 2tI)

    xv = xv_ref[...]                                             # (tT, 2r) bf16
    gate = gu[:, :tI] + jnp.dot(
        xv[:, :r], u1_ref[...], preferred_element_type=jnp.float32)
    up = gu[:, tI:] + jnp.dot(
        xv[:, r:], u3_ref[...], preferred_element_type=jnp.float32)

    # Mixtral hidden_act == silu
    h = (jax.nn.silu(gate) * up).astype(jnp.bfloat16)            # (tT, tI) bf16

    # Partial down-projection contributions for this I-tile (f32 accumulation).
    acc_ref[...] += jnp.dot(h, w2_ref[...], preferred_element_type=jnp.float32)
    hv2_ref[...] += jnp.dot(h, v2_ref[...], preferred_element_type=jnp.float32)

    @pl.when(i == n_i - 1)
    def _finalize():
        hv2 = hv2_ref[...].astype(jnp.bfloat16)                  # round like bf16 Linear
        out = acc_ref[...] + jnp.dot(
            hv2, u2_ref[...], preferred_element_type=jnp.float32)
        o_ref[...] = out.astype(o_ref.dtype)


# ---------------------------------------------------------------------------
# Wrapper: padding, tile selection, weight interleaving, pallas_call
# ---------------------------------------------------------------------------
def meanw_deltauv_forward(x, params, *, t_tile=256, i_tile=512):
    """x: [T, H] bf16. params: dict of pre-transposed bf16 weights (in, out)."""
    T, H = x.shape
    I = params["w1"].shape[1]
    r0 = params["v1"].shape[1]

    # --- pad low-rank dim to a multiple of 128 (zeros leave the math unchanged)
    r = _round_up(r0, 128)

    def pad_out(w):   # pad output (column) dim to r
        return jnp.pad(w, ((0, 0), (0, r - w.shape[1])))

    def pad_in(w):    # pad input (row) dim to r
        return jnp.pad(w, ((0, r - w.shape[0]), (0, 0)))

    v1, u1 = pad_out(params["v1"]), pad_in(params["u1"])
    v3, u3 = pad_out(params["v3"]), pad_in(params["u3"])
    v2, u2 = pad_out(params["v2"]), pad_in(params["u2"])
    v13 = jnp.concatenate([v1, v3], axis=1)                      # (H, 2r)

    # --- token tiling: pad T to a multiple of 16 (bf16 sublane packing) and tT
    T_pad = _round_up(T, 16)
    tT = min(t_tile, T_pad)
    T_pad = _round_up(T_pad, tT)
    x_p = jnp.pad(x, ((0, T_pad - T), (0, 0))) if T_pad != T else x

    # --- intermediate tiling + interleaved [w1 | w3] column tiles
    tI = _pick_i_tile(I, i_tile)
    nI = I // tI
    w1r = params["w1"].reshape(H, nI, tI)
    w3r = params["w3"].reshape(H, nI, tI)
    w13 = jnp.concatenate([w1r, w3r], axis=-1).reshape(H, 2 * I)  # (H, 2I)
    w2 = params["w2"]                                             # (I, H)

    # --- advisory cost estimate for the XLA scheduler
    flops = 2 * T_pad * (
        H * 2 * I          # fused gate/up mean matmul
        + H * 2 * r        # x @ [v1|v3]
        + r * 2 * I        # u1 / u3
        + I * H            # h @ w2
        + I * r            # h @ v2
        + r * H            # hv2 @ u2
    )
    transcendentals = T_pad * I                                   # exp in silu
    bytes_accessed = 2 * (
        x_p.size + w13.size + v13.size + u1.size + u3.size
        + w2.size + v2.size + u2.size + T_pad * H
    )

    out = pl.pallas_call(
        meanw_deltauv_kernel,
        out_shape=jax.ShapeDtypeStruct((T_pad, H), jnp.bfloat16),
        grid_spec=pltpu.PrefetchScalarGridSpec(
            num_scalar_prefetch=0,
            grid=(T_pad // tT, nI),
            in_specs=[
                pl.BlockSpec((tT, H), lambda t, i: (t, 0)),        # x
                pl.BlockSpec((H, 2 * tI), lambda t, i: (0, i)),    # w1|w3 tiles
                pl.BlockSpec((H, 2 * r), lambda t, i: (0, 0)),     # v1|v3
                pl.BlockSpec((r, tI), lambda t, i: (0, i)),        # u1 tiles
                pl.BlockSpec((r, tI), lambda t, i: (0, i)),        # u3 tiles
                pl.BlockSpec((tI, H), lambda t, i: (i, 0)),        # w2 tiles
                pl.BlockSpec((tI, r), lambda t, i: (i, 0)),        # v2 tiles
                pl.BlockSpec((r, H), lambda t, i: (0, 0)),         # u2
            ],
            out_specs=pl.BlockSpec((tT, H), lambda t, i: (t, 0)),
            scratch_shapes=[
                pltpu.VMEM((tT, H), jnp.float32),       # down accumulator
                pltpu.VMEM((tT, r), jnp.float32),       # h @ v2 accumulator
                pltpu.VMEM((tT, 2 * r), jnp.bfloat16),  # x @ [v1|v3] cache
            ],
        ),
        compiler_params=pltpu.CompilerParams(
            dimension_semantics=("parallel", "arbitrary"),   # megacore over tokens
            vmem_limit_bytes=56 * 1024 * 1024,               # fits v7x's 64 MiB VMEM
        ),
        cost_estimate=pl.CostEstimate(
            flops=int(flops),
            transcendentals=int(transcendentals),
            bytes_accessed=int(bytes_accessed),
        ),
    )(x_p, w13, v13, u1, u3, w2, v2, u2)

    return out[:T]


# ---------------------------------------------------------------------------
# Parameter init + pure-JAX reference
# ---------------------------------------------------------------------------
def make_params(key, hidden_dim, intermediate_dim, delta_ratio=1):
    """Deterministic bf16 init. nn.Linear weights are (out, in); here we store
    the transposed (in, out) layout directly."""
    r = int(intermediate_dim * hidden_dim * delta_ratio /
            (intermediate_dim + hidden_dim))
    ks = jax.random.split(key, 9)

    def w(k, shape, fan_in):
        bound = 1.0 / (fan_in ** 0.5)
        return jax.random.uniform(
            k, shape, minval=-bound, maxval=bound, dtype=jnp.float32
        ).astype(jnp.bfloat16)

    params = {
        "w1": w(ks[0], (hidden_dim, intermediate_dim), hidden_dim),        # gate
        "w3": w(ks[1], (hidden_dim, intermediate_dim), hidden_dim),        # up
        "w2": w(ks[2], (intermediate_dim, hidden_dim), intermediate_dim),  # down
        "v1": w(ks[3], (hidden_dim, r), hidden_dim),
        "u1": w(ks[4], (r, intermediate_dim), r),
        "v3": w(ks[5], (hidden_dim, r), hidden_dim),
        "u3": w(ks[6], (r, intermediate_dim), r),
        "v2": w(ks[7], (intermediate_dim, r), intermediate_dim),
        "u2": w(ks[8], (r, hidden_dim), r),
    }
    return params, r


def reference_forward(x, p):
    mm = functools.partial(jnp.dot, preferred_element_type=jnp.float32)
    bf16 = jnp.bfloat16
    gate = mm(x, p["w1"]) + mm(mm(x, p["v1"]).astype(bf16), p["u1"])
    up = mm(x, p["w3"]) + mm(mm(x, p["v3"]).astype(bf16), p["u3"])
    h = (jax.nn.silu(gate) * up).astype(bf16)
    down = mm(h, p["w2"]) + mm(mm(h, p["v2"]).astype(bf16), p["u2"])
    return down.astype(bf16)


# TODO(synk): probe_process / pruning (HiddenRepresentationPruning,
# out_dim_indices gathers) and the shared_infer branches are host-side control
# logic with data-dependent column selection; only the dense test_stage path is
# implemented here.

if __name__ == "__main__":
    # Small Mixtral-like MLP: hidden=128, intermediate=512 -> low rank r=102
    # (padded to 128 inside the wrapper). T=18 exercises token padding; the
    # i_tile=256 choice gives 2 reduction steps to exercise the accumulator.
    batch, seq = 2, 9
    hidden_dim, intermediate_dim = 128, 512

    key = jax.random.PRNGKey(0)
    kx, kp = jax.random.split(key)
    params, r = make_params(kp, hidden_dim, intermediate_dim, delta_ratio=1)

    x = jax.random.normal(
        kx, (batch * seq, hidden_dim), dtype=jnp.float32
    ).astype(jnp.bfloat16)  # tokens flattened: [T, H]

    out = meanw_deltauv_forward(x, params, t_tile=256, i_tile=256)
    out = jax.block_until_ready(out)

    ref = reference_forward(x, params)
    assert out.shape == (batch * seq, hidden_dim), out.shape
    assert out.dtype == jnp.bfloat16, out.dtype
    err = jnp.max(jnp.abs(out.astype(jnp.float32) - ref.astype(jnp.float32)))
    assert float(err) < 0.25, f"max abs err {err}"

    print("KERNEL_OK")
</pallas_src>

<mosaic_0001>
module attributes {stable_mosaic.version = 11 : i64} {
  func.func @meanw_deltauv_kernel(%arg0: i32, %arg1: i32, %arg2: memref<32x128xbf16, #tpu.memory_space<vmem>>, %arg3: memref<128x512xbf16, #tpu.memory_space<vmem>>, %arg4: memref<128x256xbf16, #tpu.memory_space<vmem>>, %arg5: memref<128x256xbf16, #tpu.memory_space<vmem>>, %arg6: memref<128x256xbf16, #tpu.memory_space<vmem>>, %arg7: memref<256x128xbf16, #tpu.memory_space<vmem>>, %arg8: memref<256x128xbf16, #tpu.memory_space<vmem>>, %arg9: memref<128x128xbf16, #tpu.memory_space<vmem>>, %arg10: memref<32x128xbf16, #tpu.memory_space<vmem>>, %arg11: memref<32x128xf32, #tpu.memory_space<vmem>>, %arg12: memref<32x128xf32, #tpu.memory_space<vmem>>, %arg13: memref<32x256xbf16, #tpu.memory_space<vmem>>) attributes {dimension_semantics = [#tpu.dimension_semantics<parallel>, #tpu.dimension_semantics<arbitrary>], iteration_bounds = array<i64: 1, 2>, scalar_prefetch = 0 : i64, scratch_operands = 3 : i64, tpu.core_type = #tpu.core_type<tc>, window_params = [{transform_indices = @transform_0, window_bounds = array<i64: 32, 128>}, {transform_indices = @transform_1, window_bounds = array<i64: 128, 512>}, {pipeline_mode = #tpu.pipeline_mode<synchronous>, transform_indices = @transform_2, window_bounds = array<i64: 128, 256>}, {transform_indices = @transform_3, window_bounds = array<i64: 128, 256>}, {transform_indices = @transform_4, window_bounds = array<i64: 128, 256>}, {transform_indices = @transform_5, window_bounds = array<i64: 256, 128>}, {transform_indices = @transform_6, window_bounds = array<i64: 256, 128>}, {pipeline_mode = #tpu.pipeline_mode<synchronous>, transform_indices = @transform_7, window_bounds = array<i64: 128, 128>}, {transform_indices = @transform_8, window_bounds = array<i64: 32, 128>}]} {
    %c0_i32 = arith.constant 0 : i32
    %0 = arith.cmpi eq, %arg1, %c0_i32 : i32
    %1 = arith.extui %0 : i1 to i32
    %c0_i32_0 = arith.constant 0 : i32
    %2 = arith.cmpi ne, %1, %c0_i32_0 : i32
    scf.if %2 {
      %cst_28 = arith.constant 0.000000e+00 : f32
      %38 = vector.broadcast %cst_28 : f32 to vector<32x128xf32>
      %c0_29 = arith.constant 0 : index
      %c0_30 = arith.constant 0 : index
      %39 = vector.load %arg11[%c0_29, %c0_30] : memref<32x128xf32, #tpu.memory_space<vmem>>, vector<32x128xf32>
      tpu.vector_store %arg11[%c0_29, %c0_30], %38 {strides = array<i32>} : memref<32x128xf32, #tpu.memory_space<vmem>>, vector<32x128xf32>,
      %cst_31 = arith.constant 0.000000e+00 : f32
      %40 = vector.broadcast %cst_31 : f32 to vector<32x128xf32>
      %c0_32 = arith.constant 0 : index
      %c0_33 = arith.constant 0 : index
      %41 = vector.load %arg12[%c0_32, %c0_33] : memref<32x128xf32, #tpu.memory_space<vmem>>, vector<32x128xf32>
      tpu.vector_store %arg12[%c0_32, %c0_33], %40 {strides = array<i32>} : memref<32x128xf32, #tpu.memory_space<vmem>>, vector<32x128xf32>,
      %c0_34 = arith.constant 0 : index
      %c0_35 = arith.constant 0 : index
      %42 = vector.load %arg2[%c0_34, %c0_35] : memref<32x128xbf16, #tpu.memory_space<vmem>>, vector<32x128xbf16>
      %c0_36 = arith.constant 0 : index
      %c0_37 = arith.constant 0 : index
      %43 = vector.load %arg4[%c0_36, %c0_37] : memref<128x256xbf16, #tpu.memory_space<vmem>>, vector<128x256xbf16>
      %cst_38 = arith.constant dense<0.000000e+00> : vector<32x256xf32>
      %44 = tpu.matmul %42, %43, %cst_38 {dimension_numbers = #tpu.dot_dimension_numbers<[1], [0], [0], [1], [0, 0, 1, 1], [], []>} : vector<32x128xbf16>, vector<128x256xbf16>, vector<32x256xf32> -> vector<32x256xf32>
      %45 = arith.truncf %44 : vector<32x256xf32> to vector<32x256xbf16>
      %c0_39 = arith.constant 0 : index
      %c0_40 = arith.constant 0 : index
      %46 = vector.load %arg13[%c0_39, %c0_40] : memref<32x256xbf16, #tpu.memory_space<vmem>>, vector<32x256xbf16>
      tpu.vector_store %arg13[%c0_39, %c0_40], %45 {strides = array<i32>} : memref<32x256xbf16, #tpu.memory_space<vmem>>, vector<32x256xbf16>,
    } else {
    }
    %c0 = arith.constant 0 : index
    %c0_1 = arith.constant 0 : index
    %3 = vector.load %arg2[%c0, %c0_1] : memref<32x128xbf16, #tpu.memory_space<vmem>>, vector<32x128xbf16>
    %c0_2 = arith.constant 0 : index
    %c0_3 = arith.constant 0 : index
    %4 = vector.load %arg3[%c0_2, %c0_3] : memref<128x512xbf16, #tpu.memory_space<vmem>>, vector<128x512xbf16>
    %cst = arith.constant dense<0.000000e+00> : vector<32x512xf32>
    %5 = tpu.matmul %3, %4, %cst {dimension_numbers = #tpu.dot_dimension_numbers<[1], [0], [0], [1], [0, 0, 1, 1], [], []>} : vector<32x128xbf16>, vector<128x512xbf16>, vector<32x512xf32> -> vector<32x512xf32>
    %c0_4 = arith.constant 0 : index
    %c0_5 = arith.constant 0 : index
    %6 = vector.load %arg13[%c0_4, %c0_5] : memref<32x256xbf16, #tpu.memory_space<vmem>>, vector<32x256xbf16>
    %7 = vector.extract_strided_slice %5 {offsets = [0, 0], sizes = [32, 256], strides = [1, 1]} : vector<32x512xf32> to vector<32x256xf32>
    %8 = vector.extract_strided_slice %6 {offsets = [0, 0], sizes = [32, 128], strides = [1, 1]} : vector<32x256xbf16> to vector<32x128xbf16>
    %c0_6 = arith.constant 0 : index
    %c0_7 = arith.constant 0 : index
    %9 = vector.load %arg5[%c0_6, %c0_7] : memref<128x256xbf16, #tpu.memory_space<vmem>>, vector<128x256xbf16>
    %cst_8 = arith.constant dense<0.000000e+00> : vector<32x256xf32>
    %10 = tpu.matmul %8, %9, %cst_8 {dimension_numbers = #tpu.dot_dimension_numbers<[1], [0], [0], [1], [0, 0, 1, 1], [], []>} : vector<32x128xbf16>, vector<128x256xbf16>, vector<32x256xf32> -> vector<32x256xf32>
    %11 = arith.addf %7, %10 : vector<32x256xf32>
    %12 = vector.extract_strided_slice %5 {offsets = [0, 256], sizes = [32, 256], strides = [1, 1]} : vector<32x512xf32> to vector<32x256xf32>
    %13 = vector.extract_strided_slice %6 {offsets = [0, 128], sizes = [32, 128], strides = [1, 1]} : vector<32x256xbf16> to vector<32x128xbf16>
    %c0_9 = arith.constant 0 : index
    %c0_10 = arith.constant 0 : index
    %14 = vector.load %arg6[%c0_9, %c0_10] : memref<128x256xbf16, #tpu.memory_space<vmem>>, vector<128x256xbf16>
    %cst_11 = arith.constant dense<0.000000e+00> : vector<32x256xf32>
    %15 = tpu.matmul %13, %14, %cst_11 {dimension_numbers = #tpu.dot_dimension_numbers<[1], [0], [0], [1], [0, 0, 1, 1], [], []>} : vector<32x128xbf16>, vector<128x256xbf16>, vector<32x256xf32> -> vector<32x256xf32>
    %16 = arith.addf %12, %15 : vector<32x256xf32>
    %17 = arith.negf %11 : vector<32x256xf32>
    %18 = math.exp %17 : vector<32x256xf32>
    %cst_12 = arith.constant 1.000000e+00 : f32
    %19 = vector.broadcast %cst_12 : f32 to vector<32x256xf32>
    %20 = arith.addf %19, %18 : vector<32x256xf32>
    %21 = arith.divf %19, %20 : vector<32x256xf32>
    %22 = arith.mulf %11, %21 : vector<32x256xf32>
    %23 = arith.mulf %22, %16 : vector<32x256xf32>
    %24 = arith.truncf %23 : vector<32x256xf32> to vector<32x256xbf16>
    %c0_13 = arith.constant 0 : index
    %c0_14 = arith.constant 0 : index
    %25 = vector.load %arg11[%c0_13, %c0_14] : memref<32x128xf32, #tpu.memory_space<vmem>>, vector<32x128xf32>
    %c0_15 = arith.constant 0 : index
    %c0_16 = arith.constant 0 : index
    %26 = vector.load %arg7[%c0_15, %c0_16] : memref<256x128xbf16, #tpu.memory_space<vmem>>, vector<256x128xbf16>
    %cst_17 = arith.constant dense<0.000000e+00> : vector<32x128xf32>
    %27 = tpu.matmul %24, %26, %cst_17 {dimension_numbers = #tpu.dot_dimension_numbers<[1], [0], [0], [1], [0, 0, 1, 1], [], []>} : vector<32x256xbf16>, vector<256x128xbf16>, vector<32x128xf32> -> vector<32x128xf32>
    %28 = arith.addf %25, %27 : vector<32x128xf32>
    %c0_18 = arith.constant 0 : index
    %c0_19 = arith.constant 0 : index
    %29 = vector.load %arg11[%c0_18, %c0_19] : memref<32x128xf32, #tpu.memory_space<vmem>>, vector<32x128xf32>
    tpu.vector_store %arg11[%c0_18, %c0_19], %28 {strides = array<i32>} : memref<32x128xf32, #tpu.memory_space<vmem>>, vector<32x128xf32>,
    %c0_20 = arith.constant 0 : index
    %c0_21 = arith.constant 0 : index
    %30 = vector.load %arg12[%c0_20, %c0_21] : memref<32x128xf32, #tpu.memory_space<vmem>>, vector<32x128xf32>
    %c0_22 = arith.constant 0 : index
    %c0_23 = arith.constant 0 : index
    %31 = vector.load %arg8[%c0_22, %c0_23] : memref<256x128xbf16, #tpu.memory_space<vmem>>, vector<256x128xbf16>
    %cst_24 = arith.constant dense<0.000000e+00> : vector<32x128xf32>
    %32 = tpu.matmul %24, %31, %cst_24 {dimension_numbers = #tpu.dot_dimension_numbers<[1], [0], [0], [1], [0, 0, 1, 1], [], []>} : vector<32x256xbf16>, vector<256x128xbf16>, vector<32x128xf32> -> vector<32x128xf32>
    %33 = arith.addf %30, %32 : vector<32x128xf32>
    %c0_25 = arith.constant 0 : index
    %c0_26 = arith.constant 0 : index
    %34 = vector.load %arg12[%c0_25, %c0_26] : memref<32x128xf32, #tpu.memory_space<vmem>>, vector<32x128xf32>
    tpu.vector_store %arg12[%c0_25, %c0_26], %33 {strides = array<i32>} : memref<32x128xf32, #tpu.memory_space<vmem>>, vector<32x128xf32>,
    %c1_i32 = arith.constant 1 : i32
    %35 = arith.cmpi eq, %arg1, %c1_i32 : i32
    %36 = arith.extui %35 : i1 to i32
    %c0_i32_27 = arith.constant 0 : i32
    %37 = arith.cmpi ne, %36, %c0_i32_27 : i32
    scf.if %37 {
      %c0_28 = arith.constant 0 : index
      %c0_29 = arith.constant 0 : index
      %38 = vector.load %arg12[%c0_28, %c0_29] : memref<32x128xf32, #tpu.memory_space<vmem>>, vector<32x128xf32>
      %39 = arith.truncf %38 : vector<32x128xf32> to vector<32x128xbf16>
      %c0_30 = arith.constant 0 : index
      %c0_31 = arith.constant 0 : index
      %40 = vector.load %arg11[%c0_30, %c0_31] : memref<32x128xf32, #tpu.memory_space<vmem>>, vector<32x128xf32>
      %c0_32 = arith.constant 0 : index
      %c0_33 = arith.constant 0 : index
      %41 = vector.load %arg9[%c0_32, %c0_33] : memref<128x128xbf16, #tpu.memory_space<vmem>>, vector<128x128xbf16>
      %cst_34 = arith.constant dense<0.000000e+00> : vector<32x128xf32>
      %42 = tpu.matmul %39, %41, %cst_34 {dimension_numbers = #tpu.dot_dimension_numbers<[1], [0], [0], [1], [0, 0, 1, 1], [], []>} : vector<32x128xbf16>, vector<128x128xbf16>, vector<32x128xf32> -> vector<32x128xf32>
      %43 = arith.addf %40, %42 : vector<32x128xf32>
      %44 = arith.truncf %43 : vector<32x128xf32> to vector<32x128xbf16>
      %c0_35 = arith.constant 0 : index
      %c0_36 = arith.constant 0 : index
      %45 = vector.load %arg10[%c0_35, %c0_36] : memref<32x128xbf16, #tpu.memory_space<vmem>>, vector<32x128xbf16>
      tpu.vector_store %arg10[%c0_35, %c0_36], %44 {strides = array<i32>} : memref<32x128xbf16, #tpu.memory_space<vmem>>, vector<32x128xbf16>,
    } else {
    }
    return
  }
  func.func @transform_0(%arg0: i32, %arg1: i32) -> (i32, i32) {
    %c0_i32 = arith.constant 0 : i32
    %c0_i32_0 = arith.constant 0 : i32
    return %arg0, %c0_i32 : i32, i32
  }
  func.func @transform_1(%arg0: i32, %arg1: i32) -> (i32, i32) {
    %c0_i32 = arith.constant 0 : i32
    %c0_i32_0 = arith.constant 0 : i32
    return %c0_i32, %arg1 : i32, i32
  }
  func.func @transform_2(%arg0: i32, %arg1: i32) -> (i32, i32) {
    %c0_i32 = arith.constant 0 : i32
    %c0_i32_0 = arith.constant 0 : i32
    %c0_i32_1 = arith.constant 0 : i32
    return %c0_i32, %c0_i32_0 : i32, i32
  }
  func.func @transform_3(%arg0: i32, %arg1: i32) -> (i32, i32) {
    %c0_i32 = arith.constant 0 : i32
    %c0_i32_0 = arith.constant 0 : i32
    return %c0_i32, %arg1 : i32, i32
  }
  func.func @transform_4(%arg0: i32, %arg1: i32) -> (i32, i32) {
    %c0_i32 = arith.constant 0 : i32
    %c0_i32_0 = arith.constant 0 : i32
    return %c0_i32, %arg1 : i32, i32
  }
  func.func @transform_5(%arg0: i32, %arg1: i32) -> (i32, i32) {
    %c0_i32 = arith.constant 0 : i32
    %c0_i32_0 = arith.constant 0 : i32
    return %arg1, %c0_i32 : i32, i32
  }
  func.func @transform_6(%arg0: i32, %arg1: i32) -> (i32, i32) {
    %c0_i32 = arith.constant 0 : i32
    %c0_i32_0 = arith.constant 0 : i32
    return %arg1, %c0_i32 : i32, i32
  }
  func.func @transform_7(%arg0: i32, %arg1: i32) -> (i32, i32) {
    %c0_i32 = arith.constant 0 : i32
    %c0_i32_0 = arith.constant 0 : i32
    %c0_i32_1 = arith.constant 0 : i32
    return %c0_i32, %c0_i32_0 : i32, i32
  }
  func.func @transform_8(%arg0: i32, %arg1: i32) -> (i32, i32) {
    %c0_i32 = arith.constant 0 : i32
    %c0_i32_0 = arith.constant 0 : i32
    return %arg0, %c0_i32 : i32, i32
  }
}

</mosaic_0001>

<llo_original>
// kernel: tpu_custom_call.1
$region0: #{tpu_custom_call.1}
  #allocation0 [shape = 'u32[]', space=smem, size = 0x4, offset = 0x4, fixed_abs, tag = 'smem constant byte address 0x4 - core index']
  #allocation1 [shape = 'u32[144,128]{1,0:T(1,128)}', space=vmem, size = 0x12000, scoped, tag = 'internal scratch']
  #allocation2 [shape = 'f32[32,128]{1,0:T(8,128)}', space=vmem, size = 0x4000, scoped, tag = 'scratch operand']
  #allocation3 [shape = 'f32[32,128]{1,0:T(8,128)}', space=vmem, size = 0x4000, scoped, tag = 'scratch operand']
  #allocation4 [shape = 'bf16[32,256]{1,0:T(16,128)(2,1)}', space=vmem, size = 0x4000, scoped, tag = 'scratch operand']
  %s0 = inlined_call_operand.hbm [shape: bf16[32,128], index: 0, kind: input, shape index: {}]
  %s1 = inlined_call_operand.hbm [shape: bf16[128,1024], index: 1, kind: input, shape index: {}]
  %s2 = inlined_call_operand.hbm [shape: bf16[128,256], index: 2, kind: input, shape index: {}]
  %s3 = inlined_call_operand.hbm [shape: bf16[128,512], index: 3, kind: input, shape index: {}]
  %s4 = inlined_call_operand.hbm [shape: bf16[128,512], index: 4, kind: input, shape index: {}]
  %s5 = inlined_call_operand.hbm [shape: bf16[512,128], index: 5, kind: input, shape index: {}]
  %s6 = inlined_call_operand.hbm [shape: bf16[512,128], index: 6, kind: input, shape index: {}]
  %s7 = inlined_call_operand.hbm [shape: bf16[128,128], index: 7, kind: input, shape index: {}]
  %s8 = inlined_call_operand.hbm [shape: bf16[32,128], index: 8, kind: output, shape index: {}]
  %s9 = sld [smem:[#allocation0]]
  $region105: #{tpu_custom_call.1} parent=0
    _
  %s11 = ssub.s32 1, %s9
  %s12 = scalar_select 0, %s11, %s9
  $region1: #{tpu_custom_call.1} parent=0
    #allocation5 [shape = 'u8[8192]{0}', space=vmem, size = 0x2000, scoped, tag = 'input window, operand 0, single buffered']
    #allocation6 [shape = 's32[2]{0}', space=sflag, size = 0x8, scoped, tag = 'scoped memory for tpu_custom_call.1']
    #allocation7 [shape = 's32[2]{0}', space=sflag, size = 0x8, scoped, tag = 'scoped memory for tpu_custom_call.1']
    #allocation8 [shape = 'u8[262144]{0}', space=vmem, size = 0x40000, scoped, tag = 'input window, operand 1']
    #allocation9 [shape = 's32[2]{0}', space=sflag, size = 0x8, scoped, tag = 'scoped memory for tpu_custom_call.1']
    #allocation10 [shape = 'u8[65536]{0}', space=vmem, size = 0x10000, scoped, tag = 'input window, operand 2, single buffered']
    #allocation11 [shape = 'u8[131072]{0}', space=vmem, size = 0x20000, scoped, tag = 'input window, operand 3']
    #allocation12 [shape = 's32[2]{0}', space=sflag, size = 0x8, scoped, tag = 'scoped memory for tpu_custom_call.1']
    #allocation13 [shape = 'u8[131072]{0}', space=vmem, size = 0x20000, scoped, tag = 'input window, operand 4']
    #allocation14 [shape = 'u8[131072]{0}', space=vmem, size = 0x20000, scoped, tag = 'input window, operand 5']
    #allocation15 [shape = 's32[2]{0}', space=sflag, size = 0x8, scoped, tag = 'scoped memory for tpu_custom_call.1']
    #allocation16 [shape = 'u8[131072]{0}', space=vmem, size = 0x20000, scoped, tag = 'input window, operand 6']
    #allocation17 [shape = 'u8[32768]{0}', space=vmem, size = 0x8000, scoped, tag = 'input window, operand 7, single buffered']
    #allocation18 [shape = 's32[1]{0}', space=sflag, size = 0x4, scoped, tag = 'scoped memory for tpu_custom_call.1']
    #allocation19 [shape = 'u8[8192]{0}', space=vmem, size = 0x2000, scoped, tag = 'output window, operand 0, single buffered']
    %13 = vsyncpa [#allocation6], 0
    %14 = vsyncpa [#allocation9], 0
    %s15 = scalar_lea.sflag [#allocation9], 1
    %16 = vsyncpa %s15, 0
    %17 = vsyncpa [#allocation12], 0
    %s18 = scalar_lea.sflag [#allocation12], 1
    %19 = vsyncpa %s18, 0
    %20 = vsyncpa [#allocation15], 0
    %s21 = scalar_lea.sflag [#allocation15], 1
    %22 = vsyncpa %s21, 0
    %23 = vsyncpa [#allocation18], 0
    %24 = vsyncpa [#allocation7], 0
    loop: start=0, step=1, limit=4
    $region2: #{tpu_custom_call.1} parent=1 // loop_pre_header
      _
    $region3: #{tpu_custom_call.1} parent=1 // loop_header
      %s26 = sphi 0, %s30
      %p27 = scmp.ge.s32.totalorder %s26, 4
      %s33 = sphi 0, %s45
      %s34 = sphi 0, %s41
      %s35 = sphi 0, %s33
      %s36 = sphi 0, %s34
      %s37 = sphi 0, %s35
      %s38 = sphi 0, %s36
      %s48 = sphi 0, %s50
      %s51 = sphi 0, %s48
      %s52 = sphi 0, %s51
      %s68 = sphi 0, %s52
      %s74 = sphi 0, %s76
      %s77 = sphi 0, %s74
      %s78 = sphi 0, %s77
      %s94 = sphi 0, %s78
      %s98 = sphi 0, %s98
      %s100 = sphi 0, %s98
      %s101 = sphi 0, %s100
      %s115 = sphi 0, %s101
      %s121 = sphi 0, %s123
      %s124 = sphi 0, %s121
      %s125 = sphi 0, %s124
      %s141 = sphi 0, %s125
      %s147 = sphi 0, %s149
      %s150 = sphi 0, %s147
      %s151 = sphi 0, %s150
      %s167 = sphi 0, %s151
      %s173 = sphi 0, %s175
      %s176 = sphi 0, %s173
      %s177 = sphi 0, %s176
      %s193 = sphi 0, %s177
      %s199 = sphi 0, %s201
      %s202 = sphi 0, %s199
      %s203 = sphi 0, %s202
      %s219 = sphi 0, %s203
      %s223 = sphi 0, %s223
      %s225 = sphi 0, %s223
      %s226 = sphi 0, %s225
      %s240 = sphi 0, %s226
      %s246 = sphi 0, %s248
      %s249 = sphi 0, %s246
      %s250 = sphi 0, %s249
      %s266 = sphi 0, %s250
    $region4: #{tpu_custom_call.1} parent=1 // loop_header_branch
      %29 = sbr.rel (%p27) target = $region8
    $region5: #{tpu_custom_call.1} parent=1 // loop_body
      %s31 = ssub.s32 %s26, 1
      %s32 = ssub.s32 %s26, 2
      %s39 = sadd.s32 1, %s34
      %p40 = scmp.ge.s32.totalorder %s39, 2
      %s41 = scalar_select %p40, 0, %s39
      %s42 = sadd.s32 1, %s33
      %s43 = scalar_select %p40, %s42, %s33
      %p44 = scmp.ge.s32.totalorder %s43, 1
      %s45 = scalar_select %p44, 0, %s43
      %s46 = ssub.s32 %s33, %s45
      %p47 = scmp.eq.s32.totalorder %s46, 0
      %s49 = sadd.s32 %s48, 1
      %s50 = scalar_select %p47, %s48, %s49
      %p53 = pneg %p47
      %p54 = scmp.eq.s32.totalorder %s26, 1
      %p55 = por %p53, %p54
      %p56 = scmp.ne.s32.totalorder %s48, %s51
      %p57 = scmp.eq.s32.totalorder %s26, 0
      %p58 = por %p56, %p57
      %p59 = scmp.ne.s32.totalorder %s48, %s51
      %p60 = scmp.eq.s32.totalorder %s31, 1
      %p61 = por %p59, %p60
      %p62 = scmp.ne.s32.totalorder %s51, %s52
      %p63 = scmp.eq.s32.totalorder %s31, 0
      %p64 = por %p62, %p63
      %p65 = scmp.ne.s32.totalorder %s51, %s52
      %p66 = scmp.eq.s32.totalorder %s32, 1
      %p67 = por %p65, %p66
      %p69 = scmp.ne.s32.totalorder %s52, %s68
      %p70 = scmp.eq.s32.totalorder %s32, 0
      %p71 = por %p69, %p70
      %s72 = ssub.s32 %s34, %s41
      %p73 = scmp.eq.s32.totalorder %s72, 0
      %s75 = sadd.s32 %s74, 1
      %s76 = scalar_select %p73, %s74, %s75
      %p79 = pneg %p73
      %p80 = scmp.eq.s32.totalorder %s26, 1
      %p81 = por %p79, %p80
      %p82 = scmp.ne.s32.totalorder %s74, %s77
      %p83 = scmp.eq.s32.totalorder %s26, 0
      %p84 = por %p82, %p83
      %p85 = scmp.ne.s32.totalorder %s74, %s77
      %p86 = scmp.eq.s32.totalorder %s31, 1
      %p87 = por %p85, %p86
      %p88 = scmp.ne.s32.totalorder %s77, %s78
      %p89 = scmp.eq.s32.totalorder %s31, 0
      %p90 = por %p88, %p89
      %p91 = scmp.ne.s32.totalorder %s77, %s78
      %p92 = scmp.eq.s32.totalorder %s32, 1
      %p93 = por %p91, %p92
      %p95 = scmp.ne.s32.totalorder %s78, %s94
      %p96 = scmp.eq.s32.totalorder %s32, 0
      %p97 = por %p95, %p96
      %s99 = sadd.s32 %s98, 1
      %p102 = scmp.eq.s32.totalorder %s26, 1
      %p103 = scmp.ne.s32.totalorder %s98, %s100
      %p104 = scmp.eq.s32.totalorder %s26, 0
      %p105 = por %p103, %p104
      %p106 = scmp.ne.s32.totalorder %s98, %s100
      %p107 = scmp.eq.s32.totalorder %s31, 1
      %p108 = por %p106, %p107
      %p109 = scmp.ne.s32.totalorder %s100, %s101
      %p110 = scmp.eq.s32.totalorder %s31, 0
      %p111 = por %p109, %p110
      %p112 = scmp.ne.s32.totalorder %s100, %s101
      %p113 = scmp.eq.s32.totalorder %s32, 1
      %p114 = por %p112, %p113
      %p116 = scmp.ne.s32.totalorder %s101, %s115
      %p117 = scmp.eq.s32.totalorder %s32, 0
      %p118 = por %p116, %p117
      %s119 = ssub.s32 %s34, %s41
      %p120 = scmp.eq.s32.totalorder %s119, 0
      %s122 = sadd.s32 %s121, 1
      %s123 = scalar_select %p120, %s121, %s122
      %p126 = pneg %p120
      %p127 = scmp.eq.s32.totalorder %s26, 1
      %p128 = por %p126, %p127
      %p129 = scmp.ne.s32.totalorder %s121, %s124
      %p130 = scmp.eq.s32.totalorder %s26, 0
      %p131 = por %p129, %p130
      %p132 = scmp.ne.s32.totalorder %s121, %s124
      %p133 = scmp.eq.s32.totalorder %s31, 1
      %p134 = por %p132, %p133
      %p135 = scmp.ne.s32.totalorder %s124, %s125
      %p136 = scmp.eq.s32.totalorder %s31, 0
      %p137 = por %p135, %p136
      %p138 = scmp.ne.s32.totalorder %s124, %s125
      %p139 = scmp.eq.s32.totalorder %s32, 1
      %p140 = por %p138, %p139
      %p142 = scmp.ne.s32.totalorder %s125, %s141
      %p143 = scmp.eq.s32.totalorder %s32, 0
      %p144 = por %p142, %p143
      %s145 = ssub.s32 %s34, %s41
      %p146 = scmp.eq.s32.totalorder %s145, 0
      %s148 = sadd.s32 %s147, 1
      %s149 = scalar_select %p146, %s147, %s148
      %p152 = pneg %p146
      %p153 = scmp.eq.s32.totalorder %s26, 1
      %p154 = por %p152, %p153
      %p155 = scmp.ne.s32.totalorder %s147, %s150
      %p156 = scmp.eq.s32.totalorder %s26, 0
      %p157 = por %p155, %p156
      %p158 = scmp.ne.s32.totalorder %s147, %s150
      %p159 = scmp.eq.s32.totalorder %s31, 1
      %p160 = por %p158, %p159
      %p161 = scmp.ne.s32.totalorder %s150, %s151
      %p162 = scmp.eq.s32.totalorder %s31, 0
      %p163 = por %p161, %p162
      %p164 = scmp.ne.s32.totalorder %s150, %s151
      %p165 = scmp.eq.s32.totalorder %s32, 1
      %p166 = por %p164, %p165
      %p168 = scmp.ne.s32.totalorder %s151, %s167
      %p169 = scmp.eq.s32.totalorder %s32, 0
      %p170 = por %p168, %p169
      %s171 = ssub.s32 %s34, %s41
      %p172 = scmp.eq.s32.totalorder %s171, 0
      %s174 = sadd.s32 %s173, 1
      %s175 = scalar_select %p172, %s173, %s174
      %p178 = pneg %p172
      %p179 = scmp.eq.s32.totalorder %s26, 1
      %p180 = por %p178, %p179
      %p181 = scmp.ne.s32.totalorder %s173, %s176
      %p182 = scmp.eq.s32.totalorder %s26, 0
      %p183 = por %p181, %p182
      %p184 = scmp.ne.s32.totalorder %s173, %s176
      %p185 = scmp.eq.s32.totalorder %s31, 1
      %p186 = por %p184, %p185
      %p187 = scmp.ne.s32.totalorder %s176, %s177
      %p188 = scmp.eq.s32.totalorder %s31, 0
      %p189 = por %p187, %p188
      %p190 = scmp.ne.s32.totalorder %s176, %s177
      %p191 = scmp.eq.s32.totalorder %s32, 1
      %p192 = por %p190, %p191
      %p194 = scmp.ne.s32.totalorder %s177, %s193
      %p195 = scmp.eq.s32.totalorder %s32, 0
      %p196 = por %p194, %p195
      %s197 = ssub.s32 %s34, %s41
      %p198 = scmp.eq.s32.totalorder %s197, 0
      %s200 = sadd.s32 %s199, 1
      %s201 = scalar_select %p198, %s199, %s200
      %p204 = pneg %p198
      %p205 = scmp.eq.s32.totalorder %s26, 1
      %p206 = por %p204, %p205
      %p207 = scmp.ne.s32.totalorder %s199, %s202
      %p208 = scmp.eq.s32.totalorder %s26, 0
      %p209 = por %p207, %p208
      %p210 = scmp.ne.s32.totalorder %s199, %s202
      %p211 = scmp.eq.s32.totalorder %s31, 1
      %p212 = por %p210, %p211
      %p213 = scmp.ne.s32.totalorder %s202, %s203
      %p214 = scmp.eq.s32.totalorder %s31, 0
      %p215 = por %p213, %p214
      %p216 = scmp.ne.s32.totalorder %s202, %s203
      %p217 = scmp.eq.s32.totalorder %s32, 1
      %p218 = por %p216, %p217
      %p220 = scmp.ne.s32.totalorder %s203, %s219
      %p221 = scmp.eq.s32.totalorder %s32, 0
      %p222 = por %p220, %p221
      %s224 = sadd.s32 %s223, 1
      %p227 = scmp.eq.s32.totalorder %s26, 1
      %p228 = scmp.ne.s32.totalorder %s223, %s225
      %p229 = scmp.eq.s32.totalorder %s26, 0
      %p230 = por %p228, %p229
      %p231 = scmp.ne.s32.totalorder %s223, %s225
      %p232 = scmp.eq.s32.totalorder %s31, 1
      %p233 = por %p231, %p232
      %p234 = scmp.ne.s32.totalorder %s225, %s226
      %p235 = scmp.eq.s32.totalorder %s31, 0
      %p236 = por %p234, %p235
      %p237 = scmp.ne.s32.totalorder %s225, %s226
      %p238 = scmp.eq.s32.totalorder %s32, 1
      %p239 = por %p237, %p238
      %p241 = scmp.ne.s32.totalorder %s226, %s240
      %p242 = scmp.eq.s32.totalorder %s32, 0
      %p243 = por %p241, %p242
      %s244 = ssub.s32 %s33, %s45
      %p245 = scmp.eq.s32.totalorder %s244, 0
      %s247 = sadd.s32 %s246, 1
      %s248 = scalar_select %p245, %s246, %s247
      %p251 = pneg %p245
      %p252 = scmp.eq.s32.totalorder %s26, 1
      %p253 = por %p251, %p252
      %p254 = scmp.ne.s32.totalorder %s246, %s249
      %p255 = scmp.eq.s32.totalorder %s26, 0
      %p256 = por %p254, %p255
      %p257 = scmp.ne.s32.totalorder %s246, %s249
      %p258 = scmp.eq.s32.totalorder %s31, 1
      %p259 = por %p257, %p258
      %p260 = scmp.ne.s32.totalorder %s249, %s250
      %p261 = scmp.eq.s32.totalorder %s31, 0
      %p262 = por %p260, %p261
      %p263 = scmp.ne.s32.totalorder %s249, %s250
      %p264 = scmp.eq.s32.totalorder %s32, 1
      %p265 = por %p263, %p264
      %p267 = scmp.ne.s32.totalorder %s250, %s266
      %p268 = scmp.eq.s32.totalorder %s32, 0
      %p269 = por %p267, %p268
      %p270 = scmp.le.s32.totalorder 1, %s26
      %p271 = scmp.lt.s32.totalorder %s26, 3
      %p272 = pnand %p270, %p271
      %p273 = pneg %p272
      // Predicated region
      $region9: #{tpu_custom_call.1} parent=5 // pred_check
        _
      $region10: #{tpu_custom_call.1} parent=5 // pred_check_branch
        %275 = sbr.rel (%p272) target = $region12
      $region11: #{tpu_custom_call.1} parent=5 // pred_region
        %s276 = ssub.s32 %s26, 1
        // Predicated region
        $region13: #{tpu_custom_call.1} parent=11 // pred_check
          %p277 = pneg %p64
        $region14: #{tpu_custom_call.1} parent=11 // pred_check_branch
          %279 = sbr.rel (%p277) target = $region16
        $region15: #{tpu_custom_call.1} parent=11 // pred_region
          %s280 = smul.u32 4, %s35
          %s282 = ssub.s32 256, 256
          %283 = vsyncadd [#allocation6], %s282
          %s284 = smul.addr %s280, 64
          %s285 = scalar_lea.hbm %s0, %s284
          %s286 = sshll.u32 [#allocation5], 4
          %s287 = int_to_ptr.vmem [resolvable:$true] %s286
          %292 = dma.hbm_to_vmem [thread:$0]  %s285, 256, %s287, [#allocation6], 64, 64, 4
        $region16: #{tpu_custom_call.1} parent=11 // pred_fallthru
          _
        // Predicated region
        $region17: #{tpu_custom_call.1} parent=11 // pred_check
          %p293 = pneg %p111
        $region18: #{tpu_custom_call.1} parent=11 // pred_check_branch
          %295 = sbr.rel (%p293) target = $region20
        $region19: #{tpu_custom_call.1} parent=11 // pred_region
          %s297 = ssub.s32 2048, 2048
          %298 = vsyncadd [#allocation9], %s297
          %s299 = sshll.u32 [#allocation10], 4
          %s300 = int_to_ptr.vmem [resolvable:$true] %s299
          %305 = dma.hbm_to_vmem [thread:$0]  %s2, 2048, %s300, [#allocation9], 128, 128, 8
        $region20: #{tpu_custom_call.1} parent=11 // pred_fallthru
          _
        // Predicated region
        $region21: #{tpu_custom_call.1} parent=11 // pred_check
          %p306 = pneg %p236
        $region22: #{tpu_custom_call.1} parent=11 // pred_check_branch
          %308 = sbr.rel (%p306) target = $region24
        $region23: #{tpu_custom_call.1} parent=11 // pred_region
          %s310 = ssub.s32 1024, 1024
          %311 = vsyncadd [#allocation18], %s310
          %s312 = sshll.u32 [#allocation17], 4
          %s313 = int_to_ptr.vmem [resolvable:$true] %s312
          %318 = dma.hbm_to_vmem [thread:$0]  %s7, 1024, %s313, [#allocation18], 64, 64, 4
        $region24: #{tpu_custom_call.1} parent=11 // pred_fallthru
          _
      $region12: #{tpu_custom_call.1} parent=5 // pred_fallthru
        _
      %p319 = scmp.lt.s32.totalorder %s26, 2
      // Predicated region
      $region25: #{tpu_custom_call.1} parent=5 // pred_check
        %p320 = pneg %p319
      $region26: #{tpu_custom_call.1} parent=5 // pred_check_branch
        %322 = sbr.rel (%p320) target = $region28
      $region27: #{tpu_custom_call.1} parent=5 // pred_region
        // Predicated region
        $region29: #{tpu_custom_call.1} parent=27 // pred_check
          %p323 = pneg %p84
        $region30: #{tpu_custom_call.1} parent=27 // pred_check_branch
          %325 = sbr.rel (%p323) target = $region32
        $region31: #{tpu_custom_call.1} parent=27 // pred_region
          %s326 = sand.u32 %s26, 1
          %s327 = scalar_lea.sflag [#allocation9], %s326
          %s328 = sand.u32 %s74, 1
          %s329 = smul.addr %s328, 256
          %s330 = scalar_lea.vmem [#allocation8], %s329
          %s331 = smul.u32 4, %s34
          %s333 = ssub.s32 4096, 4096
          %334 = vsyncadd %s327, %s333
          %s335 = smul.addr %s331, 64
          %s336 = scalar_lea.hbm %s1, %s335
          %s337 = sshll.u32 %s330, 4
          %s338 = int_to_ptr.vmem [resolvable:$true] %s337
          %343 = dma.hbm_to_vmem [thread:$0]  %s336, 4096, %s338, %s327, 512, 256, 16
        $region32: #{tpu_custom_call.1} parent=27 // pred_fallthru
          _
        // Predicated region
        $region33: #{tpu_custom_call.1} parent=27 // pred_check
          %p344 = pneg %p131
        $region34: #{tpu_custom_call.1} parent=27 // pred_check_branch
          %346 = sbr.rel (%p344) target = $region36
        $region35: #{tpu_custom_call.1} parent=27 // pred_region
          %s347 = sand.u32 %s26, 1
          %s348 = scalar_lea.sflag [#allocation12], %s347
          %s349 = sand.u32 %s121, 1
          %s350 = smul.addr %s349, 128
          %s351 = scalar_lea.vmem [#allocation11], %s350
          %s352 = smul.u32 2, %s34
          %s354 = ssub.s32 2048, 2048
          %355 = vsyncadd %s348, %s354
          %s356 = smul.addr %s352, 64
          %s357 = scalar_lea.hbm %s3, %s356
          %s358 = sshll.u32 %s351, 4
          %s359 = int_to_ptr.vmem [resolvable:$true] %s358
          %364 = dma.hbm_to_vmem [thread:$0]  %s357, 2048, %s359, %s348, 256, 128, 8
        $region36: #{tpu_custom_call.1} parent=27 // pred_fallthru
          _
        // Predicated region
        $region37: #{tpu_custom_call.1} parent=27 // pred_check
          %p365 = pneg %p157
        $region38: #{tpu_custom_call.1} parent=27 // pred_check_branch
          %367 = sbr.rel (%p365) target = $region40
        $region39: #{tpu_custom_call.1} parent=27 // pred_region
          %s368 = sand.u32 %s26, 1
          %s369 = scalar_lea.sflag [#allocation12], %s368
          %s370 = sand.u32 %s147, 1
          %s371 = smul.addr %s370, 128
          %s372 = scalar_lea.vmem [#allocation13], %s371
          %s373 = smul.u32 2, %s34
          %s375 = ssub.s32 2048, 2048
          %376 = vsyncadd %s369, %s375
          %s377 = smul.addr %s373, 64
          %s378 = scalar_lea.hbm %s4, %s377
          %s379 = sshll.u32 %s372, 4
          %s380 = int_to_ptr.vmem [resolvable:$true] %s379
          %385 = dma.hbm_to_vmem [thread:$0]  %s378, 2048, %s380, %s369, 256, 128, 8
        $region40: #{tpu_custom_call.1} parent=27 // pred_fallthru
          _
        // Predicated region
        $region41: #{tpu_custom_call.1} parent=27 // pred_check
          %p386 = pneg %p183
        $region42: #{tpu_custom_call.1} parent=27 // pred_check_branch
          %388 = sbr.rel (%p386) target = $region44
        $region43: #{tpu_custom_call.1} parent=27 // pred_region
          %s389 = sand.u32 %s26, 1
          %s390 = scalar_lea.sflag [#allocation15], %s389
          %s391 = sand.u32 %s173, 1
          %s392 = smul.addr %s391, 128
          %s393 = scalar_lea.vmem [#allocation14], %s392
          %s394 = smul.u32 32, %s34
          %s396 = ssub.s32 2048, 2048
          %397 = vsyncadd %s390, %s396
          %s398 = smul.addr %s394, 64
          %s399 = scalar_lea.hbm %s5, %s398
          %s400 = sshll.u32 %s393, 4
          %s401 = int_to_ptr.vmem [resolvable:$true] %s400
          %406 = dma.hbm_to_vmem [thread:$0]  %s399, 2048, %s401, %s390, 64, 64, 4
        $region44: #{tpu_custom_call.1} parent=27 // pred_fallthru
          _
        // Predicated region
        $region45: #{tpu_custom_call.1} parent=27 // pred_check
          %p407 = pneg %p209
        $region46: #{tpu_custom_call.1} parent=27 // pred_check_branch
          %409 = sbr.rel (%p407) target = $region48
        $region47: #{tpu_custom_call.1} parent=27 // pred_region
          %s410 = sand.u32 %s26, 1
          %s411 = scalar_lea.sflag [#allocation15], %s410
          %s412 = sand.u32 %s199, 1
          %s413 = smul.addr %s412, 128
          %s414 = scalar_lea.vmem [#allocation16], %s413
          %s415 = smul.u32 32, %s34
          %s417 = ssub.s32 2048, 2048
          %418 = vsyncadd %s411, %s417
          %s419 = smul.addr %s415, 64
          %s420 = scalar_lea.hbm %s6, %s419
          %s421 = sshll.u32 %s414, 4
          %s422 = int_to_ptr.vmem [resolvable:$true] %s421
          %427 = dma.hbm_to_vmem [thread:$0]  %s420, 2048, %s422, %s411, 64, 64, 4
        $region48: #{tpu_custom_call.1} parent=27 // pred_fallthru
          _
      $region28: #{tpu_custom_call.1} parent=5 // pred_fallthru
        _
      %p428 = scmp.le.s32.totalorder 1, %s26
      %p429 = scmp.lt.s32.totalorder %s26, 3
      %p430 = pnand %p428, %p429
      %p431 = pneg %p430
      // Predicated region
      $region49: #{tpu_custom_call.1} parent=5 // pred_check
        _
      $region50: #{tpu_custom_call.1} parent=5 // pred_check_branch
        %433 = sbr.rel (%p430) target = $region52
      $region51: #{tpu_custom_call.1} parent=5 // pred_region
        %s434 = ssub.s32 %s26, 1
        // Predicated region
        $region53: #{tpu_custom_call.1} parent=51 // pred_check
          %p435 = pneg %p64
        $region54: #{tpu_custom_call.1} parent=51 // pred_check_branch
          %437 = sbr.rel (%p435) target = $region56
        $region55: #{tpu_custom_call.1} parent=51 // pred_region
          %438 = dma.done [#allocation6], 256
        $region56: #{tpu_custom_call.1} parent=51 // pred_fallthru
          _
        %s439 = sand.u32 %s31, 1
        %s440 = scalar_lea.sflag [#allocation9], %s439
        %s441 = sand.u32 %s77, 1
        %s442 = smul.addr %s441, 256
        %s443 = scalar_lea.vmem [#allocation8], %s442
        // Predicated region
        $region57: #{tpu_custom_call.1} parent=51 // pred_check
          %p444 = pneg %p90
        $region58: #{tpu_custom_call.1} parent=51 // pred_check_branch
          %446 = sbr.rel (%p444) target = $region60
        $region59: #{tpu_custom_call.1} parent=51 // pred_region
          %447 = dma.done %s440, 4096
        $region60: #{tpu_custom_call.1} parent=51 // pred_fallthru
          _
        // Predicated region
        $region61: #{tpu_custom_call.1} parent=51 // pred_check
          %p448 = pneg %p111
        $region62: #{tpu_custom_call.1} parent=51 // pred_check_branch
          %450 = sbr.rel (%p448) target = $region64
        $region63: #{tpu_custom_call.1} parent=51 // pred_region
          %451 = dma.done [#allocation9], 2048
        $region64: #{tpu_custom_call.1} parent=51 // pred_fallthru
          _
        %s452 = sand.u32 %s31, 1
        %s453 = scalar_lea.sflag [#allocation12], %s452
        %s454 = sand.u32 %s124, 1
        %s455 = smul.addr %s454, 128
        %s456 = scalar_lea.vmem [#allocation11], %s455
        // Predicated region
        $region65: #{tpu_custom_call.1} parent=51 // pred_check
          %p457 = pneg %p137
        $region66: #{tpu_custom_call.1} parent=51 // pred_check_branch
          %459 = sbr.rel (%p457) target = $region68
        $region67: #{tpu_custom_call.1} parent=51 // pred_region
          %460 = dma.done %s453, 2048
        $region68: #{tpu_custom_call.1} parent=51 // pred_fallthru
          _
        %s461 = sand.u32 %s31, 1
        %s462 = scalar_lea.sflag [#allocation12], %s461
        %s463 = sand.u32 %s150, 1
        %s464 = smul.addr %s463, 128
        %s465 = scalar_lea.vmem [#allocation13], %s464
        // Predicated region
        $region69: #{tpu_custom_call.1} parent=51 // pred_check
          %p466 = pneg %p163
        $region70: #{tpu_custom_call.1} parent=51 // pred_check_branch
          %468 = sbr.rel (%p466) target = $region72
        $region71: #{tpu_custom_call.1} parent=51 // pred_region
          %469 = dma.done %s462, 2048
        $region72: #{tpu_custom_call.1} parent=51 // pred_fallthru
          _
        %s470 = sand.u32 %s31, 1
        %s471 = scalar_lea.sflag [#allocation15], %s470
        %s472 = sand.u32 %s176, 1
        %s473 = smul.addr %s472, 128
        %s474 = scalar_lea.vmem [#allocation14], %s473
        // Predicated region
        $region73: #{tpu_custom_call.1} parent=51 // pred_check
          %p475 = pneg %p189
        $region74: #{tpu_custom_call.1} parent=51 // pred_check_branch
          %477 = sbr.rel (%p475) target = $region76
        $region75: #{tpu_custom_call.1} parent=51 // pred_region
          %478 = dma.done %s471, 2048
        $region76: #{tpu_custom_call.1} parent=51 // pred_fallthru
          _
        %s479 = sand.u32 %s31, 1
        %s480 = scalar_lea.sflag [#allocation15], %s479
        %s481 = sand.u32 %s202, 1
        %s482 = smul.addr %s481, 128
        %s483 = scalar_lea.vmem [#allocation16], %s482
        // Predicated region
        $region77: #{tpu_custom_call.1} parent=51 // pred_check
          %p484 = pneg %p215
        $region78: #{tpu_custom_call.1} parent=51 // pred_check_branch
          %486 = sbr.rel (%p484) target = $region80
        $region79: #{tpu_custom_call.1} parent=51 // pred_region
          %487 = dma.done %s480, 2048
        $region80: #{tpu_custom_call.1} parent=51 // pred_fallthru
          _
        // Predicated region
        $region81: #{tpu_custom_call.1} parent=51 // pred_check
          %p488 = pneg %p236
        $region82: #{tpu_custom_call.1} parent=51 // pred_check_branch
          %490 = sbr.rel (%p488) target = $region84
        $region83: #{tpu_custom_call.1} parent=51 // pred_region
          %491 = dma.done [#allocation18], 1024
        $region84: #{tpu_custom_call.1} parent=51 // pred_fallthru
          _
        %p492 = pneg %p64
        %p493 = pneg %p61
        %s494 = sand.u32 %s31, 1
        %s495 = scalar_lea.sflag [#allocation9], %s494
        %s496 = sand.u32 %s77, 1
        %s497 = smul.addr %s496, 256
        %s498 = scalar_lea.vmem [#allocation8], %s497
        %p499 = pneg %p90
        %p500 = pneg %p87
        %p501 = pneg %p111
        %p502 = pneg %p108
        %s503 = sand.u32 %s31, 1
        %s504 = scalar_lea.sflag [#allocation12], %s503
        %s505 = sand.u32 %s124, 1
        %s506 = smul.addr %s505, 128
        %s507 = scalar_lea.vmem [#allocation11], %s506
        %p508 = pneg %p137
        %p509 = pneg %p134
        %s510 = sand.u32 %s31, 1
        %s511 = scalar_lea.sflag [#allocation12], %s510
        %s512 = sand.u32 %s150, 1
        %s513 = smul.addr %s512, 128
        %s514 = scalar_lea.vmem [#allocation13], %s513
        %p515 = pneg %p163
        %p516 = pneg %p160
        %s517 = sand.u32 %s31, 1
        %s518 = scalar_lea.sflag [#allocation15], %s517
        %s519 = sand.u32 %s176, 1
        %s520 = smul.addr %s519, 128
        %s521 = scalar_lea.vmem [#allocation14], %s520
        %p522 = pneg %p189
        %p523 = pneg %p186
        %s524 = sand.u32 %s31, 1
        %s525 = scalar_lea.sflag [#allocation15], %s524
        %s526 = sand.u32 %s202, 1
        %s527 = smul.addr %s526, 128
        %s528 = scalar_lea.vmem [#allocation16], %s527
        %p529 = pneg %p215
        %p530 = pneg %p212
        %p531 = pneg %p236
        %p532 = pneg %p233
        %p533 = pneg %p262
        %p534 = pneg %p259
        %s535 = smul.u32 4, %s35
        %s536 = smul.u32 4, %s36
        %s537 = smul.u32 2, %s36
        %s538 = smul.u32 2, %s36
        %s539 = smul.u32 32, %s36
        %s540 = smul.u32 32, %s36
        %s541 = smul.u32 4, %s35
        %p543 = scmp.eq.s32.totalorder %s36, 0
        // Predicated region
        $region85: #{tpu_custom_call.1} parent=51 // pred_check
          %p544 = pneg %p543
        $region86: #{tpu_custom_call.1} parent=51 // pred_check_branch
          %546 = sbr.rel (%p544) target = $region88
        $region87: #{tpu_custom_call.1} parent=51 // pred_region
          %547 = vst [vmem:[#allocation2] sm:$0xff] 0.0
          %548 = vst [vmem:[#allocation2 + $0x8] sm:$0xff] 0.0
          %549 = vst [vmem:[#allocation2 + $0x10] sm:$0xff] 0.0
          %550 = vst [vmem:[#allocation2 + $0x18] sm:$0xff] 0.0
          %551 = vst [vmem:[#allocation3] sm:$0xff] 0.0
          %552 = vst [vmem:[#allocation3 + $0x8] sm:$0xff] 0.0
          %553 = vst [vmem:[#allocation3 + $0x10] sm:$0xff] 0.0
          %554 = vst [vmem:[#allocation3 + $0x18] sm:$0xff] 0.0
          %v555 = vld [vmem:[#allocation5] sm:$0xf]
          %v556 = vld [vmem:[#allocation5 + $0x4] sm:$0xf]
          %v557 = vld [vmem:[#allocation5 + $0x8] sm:$0xf]
          %v558 = vld [vmem:[#allocation5 + $0xc] sm:$0xf]
          %v559 = vld [vmem:[#allocation10] sm:$0xff]
          %v560 = vld [vmem:[#allocation10 + $0x8] sm:$0xff]
          %v561 = vld [vmem:[#allocation10 + $0x10] sm:$0xff]
          %v562 = vld [vmem:[#allocation10 + $0x18] sm:$0xff]
          %v563 = vld [vmem:[#allocation10 + $0x20] sm:$0xff]
          %v564 = vld [vmem:[#allocation10 + $0x28] sm:$0xff]
          %v565 = vld [vmem:[#allocation10 + $0x30] sm:$0xff]
          %v566 = vld [vmem:[#allocation10 + $0x38] sm:$0xff]
          %v567 = vld [vmem:[#allocation10 + $0x40] sm:$0xff]
          %v568 = vld [vmem:[#allocation10 + $0x48] sm:$0xff]
          %v569 = vld [vmem:[#allocation10 + $0x50] sm:$0xff]
          %v570 = vld [vmem:[#allocation10 + $0x58] sm:$0xff]
          %v571 = vld [vmem:[#allocation10 + $0x60] sm:$0xff]
          %v572 = vld [vmem:[#allocation10 + $0x68] sm:$0xff]
          %v573 = vld [vmem:[#allocation10 + $0x70] sm:$0xff]
          %v574 = vld [vmem:[#allocation10 + $0x78] sm:$0xff]
          %v579 = vunpack.c.l.b16 %v555
          %v580 = vunpack.c.l.b16 %v556
          %v581 = vunpack.c.l.b16 %v557
          %v582 = vunpack.c.l.b16 %v558
          %v583 = vpack.c.b16 %v580, %v579
          %v584 = vpack.c.b16 %v582, %v581
          %v603 = vunpack.c.l.b16 %v559
          %v604 = vunpack.c.h.b16 %v559
          %v605 = vunpack.c.l.b16 %v560
          %v606 = vunpack.c.h.b16 %v560
          %v607 = vunpack.c.l.b16 %v561
          %v608 = vunpack.c.h.b16 %v561
          %v609 = vunpack.c.l.b16 %v562
          %v610 = vunpack.c.h.b16 %v562
          %v611 = vunpack.c.l.b16 %v563
          %v612 = vunpack.c.h.b16 %v563
          %v613 = vunpack.c.l.b16 %v564
          %v614 = vunpack.c.h.b16 %v564
          %v615 = vunpack.c.l.b16 %v565
          %v616 = vunpack.c.h.b16 %v565
          %v617 = vunpack.c.l.b16 %v566
          %v618 = vunpack.c.h.b16 %v566
          %v619 = vunpack.c.l.b16 %v567
          %v620 = vunpack.c.h.b16 %v567
          %v621 = vunpack.c.l.b16 %v568
          %v622 = vunpack.c.h.b16 %v568
          %v623 = vunpack.c.l.b16 %v569
          %v624 = vunpack.c.h.b16 %v569
          %v625 = vunpack.c.l.b16 %v570
          %v626 = vunpack.c.h.b16 %v570
          %v627 = vunpack.c.l.b16 %v571
          %v628 = vunpack.c.h.b16 %v571
          %v629 = vunpack.c.l.b16 %v572
          %v630 = vunpack.c.h.b16 %v572
          %v631 = vunpack.c.l.b16 %v573
          %v632 = vunpack.c.h.b16 %v573
          %v633 = vunpack.c.l.b16 %v574
          %v634 = vunpack.c.h.b16 %v574
          %v635 = vpack.c.b16 %v605, %v603
          %v636 = vpack.c.b16 %v606, %v604
          %v637 = vpack.c.b16 %v609, %v607
          %v638 = vpack.c.b16 %v610, %v608
          %v639 = vpack.c.b16 %v613, %v611
          %v640 = vpack.c.b16 %v614, %v612
          %v641 = vpack.c.b16 %v617, %v615
          %v642 = vpack.c.b16 %v618, %v616
          %v643 = vpack.c.b16 %v621, %v619
          %v644 = vpack.c.b16 %v622, %v620
          %v645 = vpack.c.b16 %v625, %v623
          %v646 = vpack.c.b16 %v626, %v624
          %v647 = vpack.c.b16 %v629, %v627
          %v648 = vpack.c.b16 %v630, %v628
          %v649 = vpack.c.b16 %v633, %v631
          %v650 = vpack.c.b16 %v634, %v632
          %667 = vmatprep.subr.bf16.mxu0 %v636
          %668 = vmatpush1.bf16.msra.mxu0 %v635
          %669 = vmatprep.subr.bf16.mxu0 %v638
          %670 = vmatpush1.bf16.msra.mxu0 %v637
          %671 = vmatprep.subr.bf16.mxu0 %v640
          %672 = vmatpush1.bf16.msra.mxu0 %v639
          %673 = vmatprep.subr.bf16.mxu0 %v642
          %674 = vmatpush1.bf16.msra.mxu0 %v641
          %675 = vmatprep.subr.bf16.mxu0 %v644
          %676 = vmatpush1.bf16.msra.mxu0 %v643
          %677 = vmatprep.subr.bf16.mxu0 %v646
          %678 = vmatpush1.bf16.msra.mxu0 %v645
          %679 = vmatprep.subr.bf16.mxu0 %v648
          %680 = vmatpush1.bf16.msra.mxu0 %v647
          %681 = vmatprep.subr.bf16.mxu0 %v650
          %682 = vmatpush1.bf16.msra.mxu0 %v649
          %683 = vmatprep.subr.bf16.mxu0 0
          %684 = vmatpush1.bf16.msra.mxu0 0
          %685 = vmatprep.subr.bf16.mxu0 0
          %686 = vmatpush1.bf16.msra.mxu0 0
          %687 = vmatprep.subr.bf16.mxu0 0
          %688 = vmatpush1.bf16.msra.mxu0 0
          %689 = vmatprep.subr.bf16.mxu0 0
          %690 = vmatpush1.bf16.msra.mxu0 0
          %691 = vmatprep.subr.bf16.mxu0 0
          %692 = vmatpush1.bf16.msra.mxu0 0
          %693 = vmatprep.subr.bf16.mxu0 0
          %694 = vmatpush1.bf16.msra.mxu0 0
          %695 = vmatprep.subr.bf16.mxu0 0
          %696 = vmatpush1.bf16.msra.mxu0 0
          %697 = vmatprep.subr.bf16.mxu0 0
          %698 = vmatpush1.bf16.msra.mxu0 0
          %699 = vmatprep.mubr.bf16.mxu0 0
          %700 = vmatmul.mubr.bf16.gmra.mrb[0].mxu0 %v583
          %v701 = vpop.f32.mrb[0].mxu0
          %v702 = vadd.f32 0.0, %v701
          %v703 = vpop.f32.mrb[0].mxu0
          %v704 = vadd.f32 0.0, %v703
          %v705 = vpop.f32.mrb[0].mxu0
          %v706 = vadd.f32 0.0, %v705
          %v707 = vpop.f32.mrb[0].mxu0
          %v708 = vadd.f32 0.0, %v707
          %709 = vmatprep.mubr.bf16.mxu0 0
          %710 = vmatmul.mubr.bf16.gmra.mrb[0].mxu0 %v584
          %v711 = vpop.f32.mrb[0].mxu0
          %v712 = vadd.f32 0.0, %v711
          %v713 = vpop.f32.mrb[0].mxu0
          %v714 = vadd.f32 0.0, %v713
          %v715 = vpop.f32.mrb[0].mxu0
          %v716 = vadd.f32 0.0, %v715
          %v717 = vpop.f32.mrb[0].mxu0
          %v718 = vadd.f32 0.0, %v717
          %719 = vdwg.mxu0
          %v720 = vpack.c.bf16 %v706, %v702
          %v721 = vpack.c.bf16 %v708, %v704
          %v722 = vpack.c.bf16 %v716, %v712
          %v723 = vpack.c.bf16 %v718, %v714
          %724 = vst [vmem:[#allocation4] sm:$0xff] %v720
          %725 = vst [vmem:[#allocation4 + $0x8] sm:$0xff] %v721
          %726 = vst [vmem:[#allocation4 + $0x10] sm:$0xff] %v722
          %727 = vst [vmem:[#allocation4 + $0x18] sm:$0xff] %v723
        $region88: #{tpu_custom_call.1} parent=51 // pred_fallthru
          _
        %v728 = vld [vmem:[#allocation5] sm:$0xf]
        %v729 = vld [vmem:[#allocation5 + $0x4] sm:$0xf]
        %v730 = vld [vmem:[#allocation5 + $0x8] sm:$0xf]
        %v731 = vld [vmem:[#allocation5 + $0xc] sm:$0xf]
        %v732 = vld [vmem:[%s443] sm:$0xff]
        %v733 = vld [vmem:[%s443 + $0x8] sm:$0xff]
        %v734 = vld [vmem:[%s443 + $0x10] sm:$0xff]
        %v735 = vld [vmem:[%s443 + $0x18] sm:$0xff]
        %v736 = vld [vmem:[%s443 + $0x20] sm:$0xff]
        %v737 = vld [vmem:[%s443 + $0x28] sm:$0xff]
        %v738 = vld [vmem:[%s443 + $0x30] sm:$0xff]
        %v739 = vld [vmem:[%s443 + $0x38] sm:$0xff]
        %v740 = vld [vmem:[%s443 + $0x40] sm:$0xff]
        %v741 = vld [vmem:[%s443 + $0x48] sm:$0xff]
        %v742 = vld [vmem:[%s443 + $0x50] sm:$0xff]
        %v743 = vld [vmem:[%s443 + $0x58] sm:$0xff]
        %v744 = vld [vmem:[%s443 + $0x60] sm:$0xff]
        %v745 = vld [vmem:[%s443 + $0x68] sm:$0xff]
        %v746 = vld [vmem:[%s443 + $0x70] sm:$0xff]
        %v747 = vld [vmem:[%s443 + $0x78] sm:$0xff]
        %v748 = vld [vmem:[%s443 + $0x80] sm:$0xff]
        %v749 = vld [vmem:[%s443 + $0x88] sm:$0xff]
        %v750 = vld [vmem:[%s443 + $0x90] sm:$0xff]
        %v751 = vld [vmem:[%s443 + $0x98] sm:$0xff]
        %v752 = vld [vmem:[%s443 + $0xa0] sm:$0xff]
        %v753 = vld [vmem:[%s443 + $0xa8] sm:$0xff]
        %v754 = vld [vmem:[%s443 + $0xb0] sm:$0xff]
        %v755 = vld [vmem:[%s443 + $0xb8] sm:$0xff]
        %v756 = vld [vmem:[%s443 + $0xc0] sm:$0xff]
        %v757 = vld [vmem:[%s443 + $0xc8] sm:$0xff]
        %v758 = vld [vmem:[%s443 + $0xd0] sm:$0xff]
        %v759 = vld [vmem:[%s443 + $0xd8] sm:$0xff]
        %v760 = vld [vmem:[%s443 + $0xe0] sm:$0xff]
        %v761 = vld [vmem:[%s443 + $0xe8] sm:$0xff]
        %v762 = vld [vmem:[%s443 + $0xf0] sm:$0xff]
        %v763 = vld [vmem:[%s443 + $0xf8] sm:$0xff]
        %v768 = vunpack.c.l.b16 %v728
        %v769 = vunpack.c.l.b16 %v729
        %v770 = vunpack.c.l.b16 %v730
        %v771 = vunpack.c.l.b16 %v731
        %v772 = vpack.c.b16 %v769, %v768
        %v773 = vpack.c.b16 %v771, %v770
        %v808 = vunpack.c.l.b16 %v732
        %v809 = vunpack.c.h.b16 %v732
        %v810 = vunpack.c.l.b16 %v733
        %v811 = vunpack.c.h.b16 %v733
        %v812 = vunpack.c.l.b16 %v734
        %v813 = vunpack.c.h.b16 %v734
        %v814 = vunpack.c.l.b16 %v735
        %v815 = vunpack.c.h.b16 %v735
        %v816 = vunpack.c.l.b16 %v736
        %v817 = vunpack.c.h.b16 %v736
        %v818 = vunpack.c.l.b16 %v737
        %v819 = vunpack.c.h.b16 %v737
        %v820 = vunpack.c.l.b16 %v738
        %v821 = vunpack.c.h.b16 %v738
        %v822 = vunpack.c.l.b16 %v739
        %v823 = vunpack.c.h.b16 %v739
        %v824 = vunpack.c.l.b16 %v740
        %v825 = vunpack.c.h.b16 %v740
        %v826 = vunpack.c.l.b16 %v741
        %v827 = vunpack.c.h.b16 %v741
        %v828 = vunpack.c.l.b16 %v742
        %v829 = vunpack.c.h.b16 %v742
        %v830 = vunpack.c.l.b16 %v743
        %v831 = vunpack.c.h.b16 %v743
        %v832 = vunpack.c.l.b16 %v744
        %v833 = vunpack.c.h.b16 %v744
        %v834 = vunpack.c.l.b16 %v745
        %v835 = vunpack.c.h.b16 %v745
        %v836 = vunpack.c.l.b16 %v746
        %v837 = vunpack.c.h.b16 %v746
        %v838 = vunpack.c.l.b16 %v747
        %v839 = vunpack.c.h.b16 %v747
        %v840 = vunpack.c.l.b16 %v748
        %v841 = vunpack.c.h.b16 %v748
        %v842 = vunpack.c.l.b16 %v749
        %v843 = vunpack.c.h.b16 %v749
        %v844 = vunpack.c.l.b16 %v750
        %v845 = vunpack.c.h.b16 %v750
        %v846 = vunpack.c.l.b16 %v751
        %v847 = vunpack.c.h.b16 %v751
        %v848 = vunpack.c.l.b16 %v752
        %v849 = vunpack.c.h.b16 %v752
        %v850 = vunpack.c.l.b16 %v753
        %v851 = vunpack.c.h.b16 %v753
        %v852 = vunpack.c.l.b16 %v754
        %v853 = vunpack.c.h.b16 %v754
        %v854 = vunpack.c.l.b16 %v755
        %v855 = vunpack.c.h.b16 %v755
        %v856 = vunpack.c.l.b16 %v756
        %v857 = vunpack.c.h.b16 %v756
        %v858 = vunpack.c.l.b16 %v757
        %v859 = vunpack.c.h.b16 %v757
        %v860 = vunpack.c.l.b16 %v758
        %v861 = vunpack.c.h.b16 %v758
        %v862 = vunpack.c.l.b16 %v759
        %v863 = vunpack.c.h.b16 %v759
        %v864 = vunpack.c.l.b16 %v760
        %v865 = vunpack.c.h.b16 %v760
        %v866 = vunpack.c.l.b16 %v761
        %v867 = vunpack.c.h.b16 %v761
        %v868 = vunpack.c.l.b16 %v762
        %v869 = vunpack.c.h.b16 %v762
        %v870 = vunpack.c.l.b16 %v763
        %v871 = vunpack.c.h.b16 %v763
        %v872 = vpack.c.b16 %v812, %v808
        %v873 = vpack.c.b16 %v813, %v809
        %v874 = vpack.c.b16 %v814, %v810
        %v875 = vpack.c.b16 %v815, %v811
        %v876 = vpack.c.b16 %v820, %v816
        %v877 = vpack.c.b16 %v821, %v817
        %v878 = vpack.c.b16 %v822, %v818
        %v879 = vpack.c.b16 %v823, %v819
        %v880 = vpack.c.b16 %v828, %v824
        %v881 = vpack.c.b16 %v829, %v825
        %v882 = vpack.c.b16 %v830, %v826
        %v883 = vpack.c.b16 %v831, %v827
        %v884 = vpack.c.b16 %v836, %v832
        %v885 = vpack.c.b16 %v837, %v833
        %v886 = vpack.c.b16 %v838, %v834
        %v887 = vpack.c.b16 %v839, %v835
        %v888 = vpack.c.b16 %v844, %v840
        %v889 = vpack.c.b16 %v845, %v841
        %v890 = vpack.c.b16 %v846, %v842
        %v891 = vpack.c.b16 %v847, %v843
        %v892 = vpack.c.b16 %v852, %v848
        %v893 = vpack.c.b16 %v853, %v849
        %v894 = vpack.c.b16 %v854, %v850
        %v895 = vpack.c.b16 %v855, %v851
        %v896 = vpack.c.b16 %v860, %v856
        %v897 = vpack.c.b16 %v861, %v857
        %v898 = vpack.c.b16 %v862, %v858
        %v899 = vpack.c.b16 %v863, %v859
        %v900 = vpack.c.b16 %v868, %v864
        %v901 = vpack.c.b16 %v869, %v865
        %v902 = vpack.c.b16 %v870, %v866
        %v903 = vpack.c.b16 %v871, %v867
        %936 = vmatprep.subr.bf16.mxu0 %v873
        %937 = vmatpush1.bf16.msra.mxu0 %v872
        %938 = vmatprep.subr.bf16.mxu0 %v877
        %939 = vmatpush1.bf16.msra.mxu0 %v876
        %940 = vmatprep.subr.bf16.mxu0 %v881
        %941 = vmatpush1.bf16.msra.mxu0 %v880
        %942 = vmatprep.subr.bf16.mxu0 %v885
        %943 = vmatpush1.bf16.msra.mxu0 %v884
        %944 = vmatprep.subr.bf16.mxu0 %v889
        %945 = vmatpush1.bf16.msra.mxu0 %v888
        %946 = vmatprep.subr.bf16.mxu0 %v893
        %947 = vmatpush1.bf16.msra.mxu0 %v892
        %948 = vmatprep.subr.bf16.mxu0 %v897
        %949 = vmatpush1.bf16.msra.mxu0 %v896
        %950 = vmatprep.subr.bf16.mxu0 %v901
        %951 = vmatpush1.bf16.msra.mxu0 %v900
        %952 = vmatprep.subr.bf16.mxu0 0
        %953 = vmatpush1.bf16.msra.mxu0 0
        %954 = vmatprep.subr.bf16.mxu0 0
        %955 = vmatpush1.bf16.msra.mxu0 0
        %956 = vmatprep.subr.bf16.mxu0 0
        %957 = vmatpush1.bf16.msra.mxu0 0
        %958 = vmatprep.subr.bf16.mxu0 0
        %959 = vmatpush1.bf16.msra.mxu0 0
        %960 = vmatprep.subr.bf16.mxu0 0
        %961 = vmatpush1.bf16.msra.mxu0 0
        %962 = vmatprep.subr.bf16.mxu0 0
        %963 = vmatpush1.bf16.msra.mxu0 0
        %964 = vmatprep.subr.bf16.mxu0 0
        %965 = vmatpush1.bf16.msra.mxu0 0
        %966 = vmatprep.subr.bf16.mxu0 0
        %967 = vmatpush1.bf16.msra.mxu0 0
        %968 = vmatprep.mubr.bf16.mxu0 0
        %969 = vmatmul.mubr.bf16.gmra.mrb[0].mxu0 %v772
        %v970 = vpop.f32.mrb[0].mxu0
        %v971 = vadd.f32 0.0, %v970
        %v972 = vpop.f32.mrb[0].mxu0
        %v973 = vadd.f32 0.0, %v972
        %v974 = vpop.f32.mrb[0].mxu0
        %v975 = vadd.f32 0.0, %v974
        %v976 = vpop.f32.mrb[0].mxu0
        %v977 = vadd.f32 0.0, %v976
        %978 = vmatprep.mubr.bf16.mxu0 0
        %979 = vmatmul.mubr.bf16.gmra.mrb[0].mxu0 %v773
        %v980 = vpop.f32.mrb[0].mxu0
        %v981 = vadd.f32 0.0, %v980
        %v982 = vpop.f32.mrb[0].mxu0
        %v983 = vadd.f32 0.0, %v982
        %v984 = vpop.f32.mrb[0].mxu0
        %v985 = vadd.f32 0.0, %v984
        %v986 = vpop.f32.mrb[0].mxu0
        %v987 = vadd.f32 0.0, %v986
        %988 = vdwg.mxu0
        %989 = vmatprep.subr.bf16.mxu0 %v875
        %990 = vmatpush1.bf16.msra.mxu0 %v874
        %991 = vmatprep.subr.bf16.mxu0 %v879
        %992 = vmatpush1.bf16.msra.mxu0 %v878
        %993 = vmatprep.subr.bf16.mxu0 %v883
        %994 = vmatpush1.bf16.msra.mxu0 %v882
        %995 = vmatprep.subr.bf16.mxu0 %v887
        %996 = vmatpush1.bf16.msra.mxu0 %v886
        %997 = vmatprep.subr.bf16.mxu0 %v891
        %998 = vmatpush1.bf16.msra.mxu0 %v890
        %999 = vmatprep.subr.bf16.mxu0 %v895
        %1000 = vmatpush1.bf16.msra.mxu0 %v894
        %1001 = vmatprep.subr.bf16.mxu0 %v899
        %1002 = vmatpush1.bf16.msra.mxu0 %v898
        %1003 = vmatprep.subr.bf16.mxu0 %v903
        %1004 = vmatpush1.bf16.msra.mxu0 %v902
        %1005 = vmatprep.subr.bf16.mxu0 0
        %1006 = vmatpush1.bf16.msra.mxu0 0
        %1007 = vmatprep.subr.bf16.mxu0 0
        %1008 = vmatpush1.bf16.msra.mxu0 0
        %1009 = vmatprep.subr.bf16.mxu0 0
        %1010 = vmatpush1.bf16.msra.mxu0 0
        %1011 = vmatprep.subr.bf16.mxu0 0
        %1012 = vmatpush1.bf16.msra.mxu0 0
        %1013 = vmatprep.subr.bf16.mxu0 0
        %1014 = vmatpush1.bf16.msra.mxu0 0
        %1015 = vmatprep.subr.bf16.mxu0 0
        %1016 = vmatpush1.bf16.msra.mxu0 0
        %1017 = vmatprep.subr.bf16.mxu0 0
        %1018 = vmatpush1.bf16.msra.mxu0 0
        %1019 = vmatprep.subr.bf16.mxu0 0
        %1020 = vmatpush1.bf16.msra.mxu0 0
        %1021 = vmatprep.mubr.bf16.mxu0 0
        %1022 = vmatmul.mubr.bf16.gmra.mrb[0].mxu0 %v772
        %v1023 = vpop.f32.mrb[0].mxu0
        %v1024 = vadd.f32 0.0, %v1023
        %v1025 = vpop.f32.mrb[0].mxu0
        %v1026 = vadd.f32 0.0, %v1025
        %v1027 = vpop.f32.mrb[0].mxu0
        %v1028 = vadd.f32 0.0, %v1027
        %v1029 = vpop.f32.mrb[0].mxu0
        %v1030 = vadd.f32 0.0, %v1029
        %1031 = vmatprep.mubr.bf16.mxu0 0
        %1032 = vmatmul.mubr.bf16.gmra.mrb[0].mxu0 %v773
        %v1033 = vpop.f32.mrb[0].mxu0
        %v1034 = vadd.f32 0.0, %v1033
        %v1035 = vpop.f32.mrb[0].mxu0
        %v1036 = vadd.f32 0.0, %v1035
        %v1037 = vpop.f32.mrb[0].mxu0
        %v1038 = vadd.f32 0.0, %v1037
        %v1039 = vpop.f32.mrb[0].mxu0
        %v1040 = vadd.f32 0.0, %v1039
        %1041 = vdwg.mxu0
        %v1042 = vld [vmem:[#allocation4] sm:$0xff]
        %v1043 = vld [vmem:[#allocation4 + $0x8] sm:$0xff]
        %v1044 = vld [vmem:[#allocation4 + $0x10] sm:$0xff]
        %v1045 = vld [vmem:[#allocation4 + $0x18] sm:$0xff]
        %v1046 = vld [vmem:[%s456] sm:$0xff]
        %v1047 = vld [vmem:[%s456 + $0x8] sm:$0xff]
        %v1048 = vld [vmem:[%s456 + $0x10] sm:$0xff]
        %v1049 = vld [vmem:[%s456 + $0x18] sm:$0xff]
        %v1050 = vld [vmem:[%s456 + $0x20] sm:$0xff]
        %v1051 = vld [vmem:[%s456 + $0x28] sm:$0xff]
        %v1052 = vld [vmem:[%s456 + $0x30] sm:$0xff]
        %v1053 = vld [vmem:[%s456 + $0x38] sm:$0xff]
        %v1054 = vld [vmem:[%s456 + $0x40] sm:$0xff]
        %v1055 = vld [vmem:[%s456 + $0x48] sm:$0xff]
        %v1056 = vld [vmem:[%s456 + $0x50] sm:$0xff]
        %v1057 = vld [vmem:[%s456 + $0x58] sm:$0xff]
        %v1058 = vld [vmem:[%s456 + $0x60] sm:$0xff]
        %v1059 = vld [vmem:[%s456 + $0x68] sm:$0xff]
        %v1060 = vld [vmem:[%s456 + $0x70] sm:$0xff]
        %v1061 = vld [vmem:[%s456 + $0x78] sm:$0xff]
        %v1078 = vunpack.c.l.b16 %v1046
        %v1079 = vunpack.c.h.b16 %v1046
        %v1080 = vunpack.c.l.b16 %v1047
        %v1081 = vunpack.c.h.b16 %v1047
        %v1082 = vunpack.c.l.b16 %v1048
        %v1083 = vunpack.c.h.b16 %v1048
        %v1084 = vunpack.c.l.b16 %v1049
        %v1085 = vunpack.c.h.b16 %v1049
        %v1086 = vunpack.c.l.b16 %v1050
        %v1087 = vunpack.c.h.b16 %v1050
        %v1088 = vunpack.c.l.b16 %v1051
        %v1089 = vunpack.c.h.b16 %v1051
        %v1090 = vunpack.c.l.b16 %v1052
        %v1091 = vunpack.c.h.b16 %v1052
        %v1092 = vunpack.c.l.b16 %v1053
        %v1093 = vunpack.c.h.b16 %v1053
        %v1094 = vunpack.c.l.b16 %v1054
        %v1095 = vunpack.c.h.b16 %v1054
        %v1096 = vunpack.c.l.b16 %v1055
        %v1097 = vunpack.c.h.b16 %v1055
        %v1098 = vunpack.c.l.b16 %v1056
        %v1099 = vunpack.c.h.b16 %v1056
        %v1100 = vunpack.c.l.b16 %v1057
        %v1101 = vunpack.c.h.b16 %v1057
        %v1102 = vunpack.c.l.b16 %v1058
        %v1103 = vunpack.c.h.b16 %v1058
        %v1104 = vunpack.c.l.b16 %v1059
        %v1105 = vunpack.c.h.b16 %v1059
        %v1106 = vunpack.c.l.b16 %v1060
        %v1107 = vunpack.c.h.b16 %v1060
        %v1108 = vunpack.c.l.b16 %v1061
        %v1109 = vunpack.c.h.b16 %v1061
        %v1110 = vpack.c.b16 %v1080, %v1078
        %v1111 = vpack.c.b16 %v1081, %v1079
        %v1112 = vpack.c.b16 %v1084, %v1082
        %v1113 = vpack.c.b16 %v1085, %v1083
        %v1114 = vpack.c.b16 %v1088, %v1086
        %v1115 = vpack.c.b16 %v1089, %v1087
        %v1116 = vpack.c.b16 %v1092, %v1090
        %v1117 = vpack.c.b16 %v1093, %v1091
        %v1118 = vpack.c.b16 %v1096, %v1094
        %v1119 = vpack.c.b16 %v1097, %v1095
        %v1120 = vpack.c.b16 %v1100, %v1098
        %v1121 = vpack.c.b16 %v1101, %v1099
        %v1122 = vpack.c.b16 %v1104, %v1102
        %v1123 = vpack.c.b16 %v1105, %v1103
        %v1124 = vpack.c.b16 %v1108, %v1106
        %v1125 = vpack.c.b16 %v1109, %v1107
        %1142 = vmatprep.subr.bf16.mxu0 %v1111
        %1143 = vmatpush1.bf16.msra.mxu0 %v1110
        %1144 = vmatprep.subr.bf16.mxu0 %v1113
        %1145 = vmatpush1.bf16.msra.mxu0 %v1112
        %1146 = vmatprep.subr.bf16.mxu0 %v1115
        %1147 = vmatpush1.bf16.msra.mxu0 %v1114
        %1148 = vmatprep.subr.bf16.mxu0 %v1117
        %1149 = vmatpush1.bf16.msra.mxu0 %v1116
        %1150 = vmatprep.subr.bf16.mxu0 %v1119
        %1151 = vmatpush1.bf16.msra.mxu0 %v1118
        %1152 = vmatprep.subr.bf16.mxu0 %v1121
        %1153 = vmatpush1.bf16.msra.mxu0 %v1120
        %1154 = vmatprep.subr.bf16.mxu0 %v1123
        %1155 = vmatpush1.bf16.msra.mxu0 %v1122
        %1156 = vmatprep.subr.bf16.mxu0 %v1125
        %1157 = vmatpush1.bf16.msra.mxu0 %v1124
        %1158 = vmatprep.subr.bf16.mxu0 0
        %1159 = vmatpush1.bf16.msra.mxu0 0
        %1160 = vmatprep.subr.bf16.mxu0 0
        %1161 = vmatpush1.bf16.msra.mxu0 0
        %1162 = vmatprep.subr.bf16.mxu0 0
        %1163 = vmatpush1.bf16.msra.mxu0 0
        %1164 = vmatprep.subr.bf16.mxu0 0
        %1165 = vmatpush1.bf16.msra.mxu0 0
        %1166 = vmatprep.subr.bf16.mxu0 0
        %1167 = vmatpush1.bf16.msra.mxu0 0
        %1168 = vmatprep.subr.bf16.mxu0 0
        %1169 = vmatpush1.bf16.msra.mxu0 0
        %1170 = vmatprep.subr.bf16.mxu0 0
        %1171 = vmatpush1.bf16.msra.mxu0 0
        %1172 = vmatprep.subr.bf16.mxu0 0
        %1173 = vmatpush1.bf16.msra.mxu0 0
        %1174 = vmatprep.mubr.bf16.mxu0 0
        %1175 = vmatmul.mubr.bf16.gmra.mrb[0].mxu0 %v1042
        %v1176 = vpop.f32.mrb[0].mxu0
        %v1177 = vadd.f32 0.0, %v1176
        %v1178 = vpop.f32.mrb[0].mxu0
        %v1179 = vadd.f32 0.0, %v1178
        %v1180 = vpop.f32.mrb[0].mxu0
        %v1181 = vadd.f32 0.0, %v1180
        %v1182 = vpop.f32.mrb[0].mxu0
        %v1183 = vadd.f32 0.0, %v1182
        %1184 = vmatprep.mubr.bf16.mxu0 0
        %1185 = vmatmul.mubr.bf16.gmra.mrb[0].mxu0 %v1044
        %v1186 = vpop.f32.mrb[0].mxu0
        %v1187 = vadd.f32 0.0, %v1186
        %v1188 = vpop.f32.mrb[0].mxu0
        %v1189 = vadd.f32 0.0, %v1188
        %v1190 = vpop.f32.mrb[0].mxu0
        %v1191 = vadd.f32 0.0, %v1190
        %v1192 = vpop.f32.mrb[0].mxu0
        %v1193 = vadd.f32 0.0, %v1192
        %1194 = vdwg.mxu0
        %v1195 = vadd.f32 %v971, %v1177
        %v1196 = vadd.f32 %v973, %v1179
        %v1197 = vadd.f32 %v975, %v1181
        %v1198 = vadd.f32 %v977, %v1183
        %v1199 = vadd.f32 %v981, %v1187
        %v1200 = vadd.f32 %v983, %v1189
        %v1201 = vadd.f32 %v985, %v1191
        %v1202 = vadd.f32 %v987, %v1193
        %v1203 = vld [vmem:[%s465] sm:$0xff]
        %v1204 = vld [vmem:[%s465 + $0x8] sm:$0xff]
        %v1205 = vld [vmem:[%s465 + $0x10] sm:$0xff]
        %v1206 = vld [vmem:[%s465 + $0x18] sm:$0xff]
        %v1207 = vld [vmem:[%s465 + $0x20] sm:$0xff]
        %v1208 = vld [vmem:[%s465 + $0x28] sm:$0xff]
        %v1209 = vld [vmem:[%s465 + $0x30] sm:$0xff]
        %v1210 = vld [vmem:[%s465 + $0x38] sm:$0xff]
        %v1211 = vld [vmem:[%s465 + $0x40] sm:$0xff]
        %v1212 = vld [vmem:[%s465 + $0x48] sm:$0xff]
        %v1213 = vld [vmem:[%s465 + $0x50] sm:$0xff]
        %v1214 = vld [vmem:[%s465 + $0x58] sm:$0xff]
        %v1215 = vld [vmem:[%s465 + $0x60] sm:$0xff]
        %v1216 = vld [vmem:[%s465 + $0x68] sm:$0xff]
        %v1217 = vld [vmem:[%s465 + $0x70] sm:$0xff]
        %v1218 = vld [vmem:[%s465 + $0x78] sm:$0xff]
        %v1235 = vunpack.c.l.b16 %v1203
        %v1236 = vunpack.c.h.b16 %v1203
        %v1237 = vunpack.c.l.b16 %v1204
        %v1238 = vunpack.c.h.b16 %v1204
        %v1239 = vunpack.c.l.b16 %v1205
        %v1240 = vunpack.c.h.b16 %v1205
        %v1241 = vunpack.c.l.b16 %v1206
        %v1242 = vunpack.c.h.b16 %v1206
        %v1243 = vunpack.c.l.b16 %v1207
        %v1244 = vunpack.c.h.b16 %v1207
        %v1245 = vunpack.c.l.b16 %v1208
        %v1246 = vunpack.c.h.b16 %v1208
        %v1247 = vunpack.c.l.b16 %v1209
        %v1248 = vunpack.c.h.b16 %v1209
        %v1249 = vunpack.c.l.b16 %v1210
        %v1250 = vunpack.c.h.b16 %v1210
        %v1251 = vunpack.c.l.b16 %v1211
        %v1252 = vunpack.c.h.b16 %v1211
        %v1253 = vunpack.c.l.b16 %v1212
        %v1254 = vunpack.c.h.b16 %v1212
        %v1255 = vunpack.c.l.b16 %v1213
        %v1256 = vunpack.c.h.b16 %v1213
        %v1257 = vunpack.c.l.b16 %v1214
        %v1258 = vunpack.c.h.b16 %v1214
        %v1259 = vunpack.c.l.b16 %v1215
        %v1260 = vunpack.c.h.b16 %v1215
        %v1261 = vunpack.c.l.b16 %v1216
        %v1262 = vunpack.c.h.b16 %v1216
        %v1263 = vunpack.c.l.b16 %v1217
        %v1264 = vunpack.c.h.b16 %v1217
        %v1265 = vunpack.c.l.b16 %v1218
        %v1266 = vunpack.c.h.b16 %v1218
        %v1267 = vpack.c.b16 %v1237, %v1235
        %v1268 = vpack.c.b16 %v1238, %v1236
        %v1269 = vpack.c.b16 %v1241, %v1239
        %v1270 = vpack.c.b16 %v1242, %v1240
        %v1271 = vpack.c.b16 %v1245, %v1243
        %v1272 = vpack.c.b16 %v1246, %v1244
        %v1273 = vpack.c.b16 %v1249, %v1247
        %v1274 = vpack.c.b16 %v1250, %v1248
        %v1275 = vpack.c.b16 %v1253, %v1251
        %v1276 = vpack.c.b16 %v1254, %v1252
        %v1277 = vpack.c.b16 %v1257, %v1255
        %v1278 = vpack.c.b16 %v1258, %v1256
        %v1279 = vpack.c.b16 %v1261, %v1259
        %v1280 = vpack.c.b16 %v1262, %v1260
        %v1281 = vpack.c.b16 %v1265, %v1263
        %v1282 = vpack.c.b16 %v1266, %v1264
        %1299 = vmatprep.subr.bf16.mxu0 %v1268
        %1300 = vmatpush1.bf16.msra.mxu0 %v1267
        %1301 = vmatprep.subr.bf16.mxu0 %v1270
        %1302 = vmatpush1.bf16.msra.mxu0 %v1269
        %1303 = vmatprep.subr.bf16.mxu0 %v1272
        %1304 = vmatpush1.bf16.msra.mxu0 %v1271
        %1305 = vmatprep.subr.bf16.mxu0 %v1274
        %1306 = vmatpush1.bf16.msra.mxu0 %v1273
        %1307 = vmatprep.subr.bf16.mxu0 %v1276
        %1308 = vmatpush1.bf16.msra.mxu0 %v1275
        %1309 = vmatprep.subr.bf16.mxu0 %v1278
        %1310 = vmatpush1.bf16.msra.mxu0 %v1277
        %1311 = vmatprep.subr.bf16.mxu0 %v1280
        %1312 = vmatpush1.bf16.msra.mxu0 %v1279
        %1313 = vmatprep.subr.bf16.mxu0 %v1282
        %1314 = vmatpush1.bf16.msra.mxu0 %v1281
        %1315 = vmatprep.subr.bf16.mxu0 0
        %1316 = vmatpush1.bf16.msra.mxu0 0
        %1317 = vmatprep.subr.bf16.mxu0 0
        %1318 = vmatpush1.bf16.msra.mxu0 0
        %1319 = vmatprep.subr.bf16.mxu0 0
        %1320 = vmatpush1.bf16.msra.mxu0 0
        %1321 = vmatprep.subr.bf16.mxu0 0
        %1322 = vmatpush1.bf16.msra.mxu0 0
        %1323 = vmatprep.subr.bf16.mxu0 0
        %1324 = vmatpush1.bf16.msra.mxu0 0
        %1325 = vmatprep.subr.bf16.mxu0 0
        %1326 = vmatpush1.bf16.msra.mxu0 0
        %1327 = vmatprep.subr.bf16.mxu0 0
        %1328 = vmatpush1.bf16.msra.mxu0 0
        %1329 = vmatprep.subr.bf16.mxu0 0
        %1330 = vmatpush1.bf16.msra.mxu0 0
        %1331 = vmatprep.mubr.bf16.mxu0 0
        %1332 = vmatmul.mubr.bf16.gmra.mrb[0].mxu0 %v1043
        %v1333 = vpop.f32.mrb[0].mxu0
        %v1334 = vadd.f32 0.0, %v1333
        %v1335 = vpop.f32.mrb[0].mxu0
        %v1336 = vadd.f32 0.0, %v1335
        %v1337 = vpop.f32.mrb[0].mxu0
        %v1338 = vadd.f32 0.0, %v1337
        %v1339 = vpop.f32.mrb[0].mxu0
        %v1340 = vadd.f32 0.0, %v1339
        %1341 = vmatprep.mubr.bf16.mxu0 0
        %1342 = vmatmul.mubr.bf16.gmra.mrb[0].mxu0 %v1045
        %v1343 = vpop.f32.mrb[0].mxu0
        %v1344 = vadd.f32 0.0, %v1343
        %v1345 = vpop.f32.mrb[0].mxu0
        %v1346 = vadd.f32 0.0, %v1345
        %v1347 = vpop.f32.mrb[0].mxu0
        %v1348 = vadd.f32 0.0, %v1347
        %v1349 = vpop.f32.mrb[0].mxu0
        %v1350 = vadd.f32 0.0, %v1349
        %1351 = vdwg.mxu0
        %v1352 = vadd.f32 %v1024, %v1334
        %v1353 = vadd.f32 %v1026, %v1336
        %v1354 = vadd.f32 %v1028, %v1338
        %v1355 = vadd.f32 %v1030, %v1340
        %v1356 = vadd.f32 %v1034, %v1344
        %v1357 = vadd.f32 %v1036, %v1346
        %v1358 = vadd.f32 %v1038, %v1348
        %v1359 = vadd.f32 %v1040, %v1350
        %v1360 = vxor.u32 %v1195, 2147483648
        %v1361 = vxor.u32 %v1196, 2147483648
        %v1362 = vxor.u32 %v1197, 2147483648
        %v1363 = vxor.u32 %v1198, 2147483648
        %v1364 = vxor.u32 %v1199, 2147483648
        %v1365 = vxor.u32 %v1200, 2147483648
        %v1366 = vxor.u32 %v1201, 2147483648
        %v1367 = vxor.u32 %v1202, 2147483648
        %v1368 = vmul.f32 %v1360, 1.442695
        %v1369 = vpow.pop %v1368
        %v1370 = vmul.f32 %v1361, 1.442695
        %v1371 = vpow.pop %v1370
        %v1372 = vmul.f32 %v1362, 1.442695
        %v1373 = vpow.pop %v1372
        %v1374 = vmul.f32 %v1363, 1.442695
        %v1375 = vpow.pop %v1374
        %v1376 = vmul.f32 %v1364, 1.442695
        %v1377 = vpow.pop %v1376
        %v1378 = vmul.f32 %v1365, 1.442695
        %v1379 = vpow.pop %v1378
        %v1380 = vmul.f32 %v1366, 1.442695
        %v1381 = vpow.pop %v1380
        %v1382 = vmul.f32 %v1367, 1.442695
        %v1383 = vpow.pop %v1382
        %v1384 = vadd.f32 %v1369, 1.0
        %v1385 = vadd.f32 %v1371, 1.0
        %v1386 = vadd.f32 %v1373, 1.0
        %v1387 = vadd.f32 %v1375, 1.0
        %v1388 = vadd.f32 %v1377, 1.0
        %v1389 = vadd.f32 %v1379, 1.0
        %v1390 = vadd.f32 %v1381, 1.0
        %v1391 = vadd.f32 %v1383, 1.0
        %v1392 = vrcp.pop %v1384
        %v1393 = vmul.f32 1.0, %v1392
        %v1394 = vrcp.pop %v1385
        %v1395 = vmul.f32 1.0, %v1394
        %v1396 = vrcp.pop %v1386
        %v1397 = vmul.f32 1.0, %v1396
        %v1398 = vrcp.pop %v1387
        %v1399 = vmul.f32 1.0, %v1398
        %v1400 = vrcp.pop %v1388
        %v1401 = vmul.f32 1.0, %v1400
        %v1402 = vrcp.pop %v1389
        %v1403 = vmul.f32 1.0, %v1402
        %v1404 = vrcp.pop %v1390
        %v1405 = vmul.f32 1.0, %v1404
        %v1406 = vrcp.pop %v1391
        %v1407 = vmul.f32 1.0, %v1406
        %v1408 = vmul.f32 %v1195, %v1393
        %v1409 = vmul.f32 %v1196, %v1395
        %v1410 = vmul.f32 %v1197, %v1397
        %v1411 = vmul.f32 %v1198, %v1399
        %v1412 = vmul.f32 %v1199, %v1401
        %v1413 = vmul.f32 %v1200, %v1403
        %v1414 = vmul.f32 %v1201, %v1405
        %v1415 = vmul.f32 %v1202, %v1407
        %v1416 = vmul.f32 %v1408, %v1352
        %v1417 = vmul.f32 %v1409, %v1353
        %v1418 = vmul.f32 %v1410, %v1354
        %v1419 = vmul.f32 %v1411, %v1355
        %v1420 = vmul.f32 %v1412, %v1356
        %v1421 = vmul.f32 %v1413, %v1357
        %v1422 = vmul.f32 %v1414, %v1358
        %v1423 = vmul.f32 %v1415, %v1359
        %v1424 = vpack.c.bf16 %v1418, %v1416
        %v1425 = vpack.c.bf16 %v1419, %v1417
        %v1426 = vpack.c.bf16 %v1422, %v1420
        %v1427 = vpack.c.bf16 %v1423, %v1421
        %v1428 = vld [vmem:[#allocation2] sm:$0xff]
        %v1429 = vld [vmem:[#allocation2 + $0x8] sm:$0xff]
        %v1430 = vld [vmem:[#allocation2 + $0x10] sm:$0xff]
        %v1431 = vld [vmem:[#allocation2 + $0x18] sm:$0xff]
        %v1432 = vld [vmem:[%s474] sm:$0xf]
        %v1433 = vld [vmem:[%s474 + $0x4] sm:$0xf]
        %v1434 = vld [vmem:[%s474 + $0x8] sm:$0xf]
        %v1435 = vld [vmem:[%s474 + $0xc] sm:$0xf]
        %v1436 = vld [vmem:[%s474 + $0x10] sm:$0xf]
        %v1437 = vld [vmem:[%s474 + $0x14] sm:$0xf]
        %v1438 = vld [vmem:[%s474 + $0x18] sm:$0xf]
        %v1439 = vld [vmem:[%s474 + $0x1c] sm:$0xf]
        %v1440 = vld [vmem:[%s474 + $0x20] sm:$0xf]
        %v1441 = vld [vmem:[%s474 + $0x24] sm:$0xf]
        %v1442 = vld [vmem:[%s474 + $0x28] sm:$0xf]
        %v1443 = vld [vmem:[%s474 + $0x2c] sm:$0xf]
        %v1444 = vld [vmem:[%s474 + $0x30] sm:$0xf]
        %v1445 = vld [vmem:[%s474 + $0x34] sm:$0xf]
        %v1446 = vld [vmem:[%s474 + $0x38] sm:$0xf]
        %v1447 = vld [vmem:[%s474 + $0x3c] sm:$0xf]
        %v1448 = vld [vmem:[%s474 + $0x40] sm:$0xf]
        %v1449 = vld [vmem:[%s474 + $0x44] sm:$0xf]
        %v1450 = vld [vmem:[%s474 + $0x48] sm:$0xf]
        %v1451 = vld [vmem:[%s474 + $0x4c] sm:$0xf]
        %v1452 = vld [vmem:[%s474 + $0x50] sm:$0xf]
        %v1453 = vld [vmem:[%s474 + $0x54] sm:$0xf]
        %v1454 = vld [vmem:[%s474 + $0x58] sm:$0xf]
        %v1455 = vld [vmem:[%s474 + $0x5c] sm:$0xf]
        %v1456 = vld [vmem:[%s474 + $0x60] sm:$0xf]
        %v1457 = vld [vmem:[%s474 + $0x64] sm:$0xf]
        %v1458 = vld [vmem:[%s474 + $0x68] sm:$0xf]
        %v1459 = vld [vmem:[%s474 + $0x6c] sm:$0xf]
        %v1460 = vld [vmem:[%s474 + $0x70] sm:$0xf]
        %v1461 = vld [vmem:[%s474 + $0x74] sm:$0xf]
        %v1462 = vld [vmem:[%s474 + $0x78] sm:$0xf]
        %v1463 = vld [vmem:[%s474 + $0x7c] sm:$0xf]
        %v1496 = vunpack.c.l.b16 %v1432
        %v1497 = vunpack.c.l.b16 %v1433
        %v1498 = vunpack.c.l.b16 %v1434
        %v1499 = vunpack.c.l.b16 %v1435
        %v1500 = vunpack.c.l.b16 %v1436
        %v1501 = vunpack.c.l.b16 %v1437
        %v1502 = vunpack.c.l.b16 %v1438
        %v1503 = vunpack.c.l.b16 %v1439
        %v1504 = vunpack.c.l.b16 %v1440
        %v1505 = vunpack.c.l.b16 %v1441
        %v1506 = vunpack.c.l.b16 %v1442
        %v1507 = vunpack.c.l.b16 %v1443
        %v1508 = vunpack.c.l.b16 %v1444
        %v1509 = vunpack.c.l.b16 %v1445
        %v1510 = vunpack.c.l.b16 %v1446
        %v1511 = vunpack.c.l.b16 %v1447
        %v1512 = vunpack.c.l.b16 %v1448
        %v1513 = vunpack.c.l.b16 %v1449
        %v1514 = vunpack.c.l.b16 %v1450
        %v1515 = vunpack.c.l.b16 %v1451
        %v1516 = vunpack.c.l.b16 %v1452
        %v1517 = vunpack.c.l.b16 %v1453
        %v1518 = vunpack.c.l.b16 %v1454
        %v1519 = vunpack.c.l.b16 %v1455
        %v1520 = vunpack.c.l.b16 %v1456
        %v1521 = vunpack.c.l.b16 %v1457
        %v1522 = vunpack.c.l.b16 %v1458
        %v1523 = vunpack.c.l.b16 %v1459
        %v1524 = vunpack.c.l.b16 %v1460
        %v1525 = vunpack.c.l.b16 %v1461
        %v1526 = vunpack.c.l.b16 %v1462
        %v1527 = vunpack.c.l.b16 %v1463
        %v1528 = vpack.c.b16 %v1497, %v1496
        %v1529 = vpack.c.b16 %v1499, %v1498
        %v1530 = vpack.c.b16 %v1501, %v1500
        %v1531 = vpack.c.b16 %v1503, %v1502
        %v1532 = vpack.c.b16 %v1505, %v1504
        %v1533 = vpack.c.b16 %v1507, %v1506
        %v1534 = vpack.c.b16 %v1509, %v1508
        %v1535 = vpack.c.b16 %v1511, %v1510
        %v1536 = vpack.c.b16 %v1513, %v1512
        %v1537 = vpack.c.b16 %v1515, %v1514
        %v1538 = vpack.c.b16 %v1517, %v1516
        %v1539 = vpack.c.b16 %v1519, %v1518
        %v1540 = vpack.c.b16 %v1521, %v1520
        %v1541 = vpack.c.b16 %v1523, %v1522
        %v1542 = vpack.c.b16 %v1525, %v1524
        %v1543 = vpack.c.b16 %v1527, %v1526
        %1560 = vmatprep.subr.bf16.mxu0 0
        %1561 = vmatpush1.bf16.msra.mxu0 %v1528
        %1562 = vmatprep.subr.bf16.mxu0 0
        %1563 = vmatpush1.bf16.msra.mxu0 %v1529
        %1564 = vmatprep.subr.bf16.mxu0 0
        %1565 = vmatpush1.bf16.msra.mxu0 %v1530
        %1566 = vmatprep.subr.bf16.mxu0 0
        %1567 = vmatpush1.bf16.msra.mxu0 %v1531
        %1568 = vmatprep.subr.bf16.mxu0 0
        %1569 = vmatpush1.bf16.msra.mxu0 %v1532
        %1570 = vmatprep.subr.bf16.mxu0 0
        %1571 = vmatpush1.bf16.msra.mxu0 %v1533
        %1572 = vmatprep.subr.bf16.mxu0 0
        %1573 = vmatpush1.bf16.msra.mxu0 %v1534
        %1574 = vmatprep.subr.bf16.mxu0 0
        %1575 = vmatpush1.bf16.msra.mxu0 %v1535
        %1576 = vmatprep.subr.bf16.mxu0 0
        %1577 = vmatpush1.bf16.msra.mxu0 %v1536
        %1578 = vmatprep.subr.bf16.mxu0 0
        %1579 = vmatpush1.bf16.msra.mxu0 %v1537
        %1580 = vmatprep.subr.bf16.mxu0 0
        %1581 = vmatpush1.bf16.msra.mxu0 %v1538
        %1582 = vmatprep.subr.bf16.mxu0 0
        %1583 = vmatpush1.bf16.msra.mxu0 %v1539
        %1584 = vmatprep.subr.bf16.mxu0 0
        %1585 = vmatpush1.bf16.msra.mxu0 %v1540
        %1586 = vmatprep.subr.bf16.mxu0 0
        %1587 = vmatpush1.bf16.msra.mxu0 %v1541
        %1588 = vmatprep.subr.bf16.mxu0 0
        %1589 = vmatpush1.bf16.msra.mxu0 %v1542
        %1590 = vmatprep.subr.bf16.mxu0 0
        %1591 = vmatpush1.bf16.msra.mxu0 %v1543
        %1592 = vmatprep.mubr.bf16.mxu0 %v1425
        %1593 = vmatmul.mubr.bf16.gmra.mrb[0].mxu0 %v1424
        %v1594 = vpop.f32.mrb[0].mxu0
        %v1595 = vadd.f32 0.0, %v1594
        %v1596 = vpop.f32.mrb[0].mxu0
        %v1597 = vpop.f32.mrb[0].mxu0
        %v1598 = vadd.f32 0.0, %v1597
        %v1599 = vpop.f32.mrb[0].mxu0
        %1600 = vmatprep.mubr.bf16.mxu0 %v1427
        %1601 = vmatmul.mubr.bf16.gmra.mrb[0].mxu0 %v1426
        %v1602 = vpop.f32.mrb[0].mxu0
        %v1603 = vadd.f32 0.0, %v1602
        %v1604 = vpop.f32.mrb[0].mxu0
        %v1605 = vpop.f32.mrb[0].mxu0
        %v1606 = vadd.f32 0.0, %v1605
        %v1607 = vpop.f32.mrb[0].mxu0
        %1608 = vdwg.mxu0
        %v1609 = vadd.f32 %v1428, %v1595
        %v1610 = vadd.f32 %v1429, %v1598
        %v1611 = vadd.f32 %v1430, %v1603
        %v1612 = vadd.f32 %v1431, %v1606
        %1613 = vst [vmem:[#allocation2] sm:$0xff] %v1609
        %1614 = vst [vmem:[#allocation2 + $0x8] sm:$0xff] %v1610
        %1615 = vst [vmem:[#allocation2 + $0x10] sm:$0xff] %v1611
        %1616 = vst [vmem:[#allocation2 + $0x18] sm:$0xff] %v1612
        %v1617 = vld [vmem:[#allocation3] sm:$0xff]
        %v1618 = vld [vmem:[#allocation3 + $0x8] sm:$0xff]
        %v1619 = vld [vmem:[#allocation3 + $0x10] sm:$0xff]
        %v1620 = vld [vmem:[#allocation3 + $0x18] sm:$0xff]
        %v1621 = vld [vmem:[%s483] sm:$0xf]
        %v1622 = vld [vmem:[%s483 + $0x4] sm:$0xf]
        %v1623 = vld [vmem:[%s483 + $0x8] sm:$0xf]
        %v1624 = vld [vmem:[%s483 + $0xc] sm:$0xf]
        %v1625 = vld [vmem:[%s483 + $0x10] sm:$0xf]
        %v1626 = vld [vmem:[%s483 + $0x14] sm:$0xf]
        %v1627 = vld [vmem:[%s483 + $0x18] sm:$0xf]
        %v1628 = vld [vmem:[%s483 + $0x1c] sm:$0xf]
        %v1629 = vld [vmem:[%s483 + $0x20] sm:$0xf]
        %v1630 = vld [vmem:[%s483 + $0x24] sm:$0xf]
        %v1631 = vld [vmem:[%s483 + $0x28] sm:$0xf]
        %v1632 = vld [vmem:[%s483 + $0x2c] sm:$0xf]
        %v1633 = vld [vmem:[%s483 + $0x30] sm:$0xf]
        %v1634 = vld [vmem:[%s483 + $0x34] sm:$0xf]
        %v1635 = vld [vmem:[%s483 + $0x38] sm:$0xf]
        %v1636 = vld [vmem:[%s483 + $0x3c] sm:$0xf]
        %v1637 = vld [vmem:[%s483 + $0x40] sm:$0xf]
        %v1638 = vld [vmem:[%s483 + $0x44] sm:$0xf]
        %v1639 = vld [vmem:[%s483 + $0x48] sm:$0xf]
        %v1640 = vld [vmem:[%s483 + $0x4c] sm:$0xf]
        %v1641 = vld [vmem:[%s483 + $0x50] sm:$0xf]
        %v1642 = vld [vmem:[%s483 + $0x54] sm:$0xf]
        %v1643 = vld [vmem:[%s483 + $0x58] sm:$0xf]
        %v1644 = vld [vmem:[%s483 + $0x5c] sm:$0xf]
        %v1645 = vld [vmem:[%s483 + $0x60] sm:$0xf]
        %v1646 = vld [vmem:[%s483 + $0x64] sm:$0xf]
        %v1647 = vld [vmem:[%s483 + $0x68] sm:$0xf]
        %v1648 = vld [vmem:[%s483 + $0x6c] sm:$0xf]
        %v1649 = vld [vmem:[%s483 + $0x70] sm:$0xf]
        %v1650 = vld [vmem:[%s483 + $0x74] sm:$0xf]
        %v1651 = vld [vmem:[%s483 + $0x78] sm:$0xf]
        %v1652 = vld [vmem:[%s483 + $0x7c] sm:$0xf]
        %v1685 = vunpack.c.l.b16 %v1621
        %v1686 = vunpack.c.l.b16 %v1622
        %v1687 = vunpack.c.l.b16 %v1623
        %v1688 = vunpack.c.l.b16 %v1624
        %v1689 = vunpack.c.l.b16 %v1625
        %v1690 = vunpack.c.l.b16 %v1626
        %v1691 = vunpack.c.l.b16 %v1627
        %v1692 = vunpack.c.l.b16 %v1628
        %v1693 = vunpack.c.l.b16 %v1629
        %v1694 = vunpack.c.l.b16 %v1630
        %v1695 = vunpack.c.l.b16 %v1631
        %v1696 = vunpack.c.l.b16 %v1632
        %v1697 = vunpack.c.l.b16 %v1633
        %v1698 = vunpack.c.l.b16 %v1634
        %v1699 = vunpack.c.l.b16 %v1635
        %v1700 = vunpack.c.l.b16 %v1636
        %v1701 = vunpack.c.l.b16 %v1637
        %v1702 = vunpack.c.l.b16 %v1638
        %v1703 = vunpack.c.l.b16 %v1639
        %v1704 = vunpack.c.l.b16 %v1640
        %v1705 = vunpack.c.l.b16 %v1641
        %v1706 = vunpack.c.l.b16 %v1642
        %v1707 = vunpack.c.l.b16 %v1643
        %v1708 = vunpack.c.l.b16 %v1644
        %v1709 = vunpack.c.l.b16 %v1645
        %v1710 = vunpack.c.l.b16 %v1646
        %v1711 = vunpack.c.l.b16 %v1647
        %v1712 = vunpack.c.l.b16 %v1648
        %v1713 = vunpack.c.l.b16 %v1649
        %v1714 = vunpack.c.l.b16 %v1650
        %v1715 = vunpack.c.l.b16 %v1651
        %v1716 = vunpack.c.l.b16 %v1652
        %v1717 = vpack.c.b16 %v1686, %v1685
        %v1718 = vpack.c.b16 %v1688, %v1687
        %v1719 = vpack.c.b16 %v1690, %v1689
        %v1720 = vpack.c.b16 %v1692, %v1691
        %v1721 = vpack.c.b16 %v1694, %v1693
        %v1722 = vpack.c.b16 %v1696, %v1695
        %v1723 = vpack.c.b16 %v1698, %v1697
        %v1724 = vpack.c.b16 %v1700, %v1699
        %v1725 = vpack.c.b16 %v1702, %v1701
        %v1726 = vpack.c.b16 %v1704, %v1703
        %v1727 = vpack.c.b16 %v1706, %v1705
        %v1728 = vpack.c.b16 %v1708, %v1707
        %v1729 = vpack.c.b16 %v1710, %v1709
        %v1730 = vpack.c.b16 %v1712, %v1711
        %v1731 = vpack.c.b16 %v1714, %v1713
        %v1732 = vpack.c.b16 %v1716, %v1715
        %1749 = vmatprep.subr.bf16.mxu0 0
        %1750 = vmatpush1.bf16.msra.mxu0 %v1717
        %1751 = vmatprep.subr.bf16.mxu0 0
        %1752 = vmatpush1.bf16.msra.mxu0 %v1718
        %1753 = vmatprep.subr.bf16.mxu0 0
        %1754 = vmatpush1.bf16.msra.mxu0 %v1719
        %1755 = vmatprep.subr.bf16.mxu0 0
        %1756 = vmatpush1.bf16.msra.mxu0 %v1720
        %1757 = vmatprep.subr.bf16.mxu0 0
        %1758 = vmatpush1.bf16.msra.mxu0 %v1721
        %1759 = vmatprep.subr.bf16.mxu0 0
        %1760 = vmatpush1.bf16.msra.mxu0 %v1722
        %1761 = vmatprep.subr.bf16.mxu0 0
        %1762 = vmatpush1.bf16.msra.mxu0 %v1723
        %1763 = vmatprep.subr.bf16.mxu0 0
        %1764 = vmatpush1.bf16.msra.mxu0 %v1724
        %1765 = vmatprep.subr.bf16.mxu0 0
        %1766 = vmatpush1.bf16.msra.mxu0 %v1725
        %1767 = vmatprep.subr.bf16.mxu0 0
        %1768 = vmatpush1.bf16.msra.mxu0 %v1726
        %1769 = vmatprep.subr.bf16.mxu0 0
        %1770 = vmatpush1.bf16.msra.mxu0 %v1727
        %1771 = vmatprep.subr.bf16.mxu0 0
        %1772 = vmatpush1.bf16.msra.mxu0 %v1728
        %1773 = vmatprep.subr.bf16.mxu0 0
        %1774 = vmatpush1.bf16.msra.mxu0 %v1729
        %1775 = vmatprep.subr.bf16.mxu0 0
        %1776 = vmatpush1.bf16.msra.mxu0 %v1730
        %1777 = vmatprep.subr.bf16.mxu0 0
        %1778 = vmatpush1.bf16.msra.mxu0 %v1731
        %1779 = vmatprep.subr.bf16.mxu0 0
        %1780 = vmatpush1.bf16.msra.mxu0 %v1732
        %1781 = vmatprep.mubr.bf16.mxu0 %v1425
        %1782 = vmatmul.mubr.bf16.gmra.mrb[0].mxu0 %v1424
        %v1783 = vpop.f32.mrb[0].mxu0
        %v1784 = vadd.f32 0.0, %v1783
        %v1785 = vpop.f32.mrb[0].mxu0
        %v1786 = vpop.f32.mrb[0].mxu0
        %v1787 = vadd.f32 0.0, %v1786
        %v1788 = vpop.f32.mrb[0].mxu0
        %1789 = vmatprep.mubr.bf16.mxu0 %v1427
        %1790 = vmatmul.mubr.bf16.gmra.mrb[0].mxu0 %v1426
        %v1791 = vpop.f32.mrb[0].mxu0
        %v1792 = vadd.f32 0.0, %v1791
        %v1793 = vpop.f32.mrb[0].mxu0
        %v1794 = vpop.f32.mrb[0].mxu0
        %v1795 = vadd.f32 0.0, %v1794
        %v1796 = vpop.f32.mrb[0].mxu0
        %1797 = vdwg.mxu0
        %v1798 = vadd.f32 %v1617, %v1784
        %v1799 = vadd.f32 %v1618, %v1787
        %v1800 = vadd.f32 %v1619, %v1792
        %v1801 = vadd.f32 %v1620, %v1795
        %1802 = vst [vmem:[#allocation3] sm:$0xff] %v1798
        %1803 = vst [vmem:[#allocation3 + $0x8] sm:$0xff] %v1799
        %1804 = vst [vmem:[#allocation3 + $0x10] sm:$0xff] %v1800
        %1805 = vst [vmem:[#allocation3 + $0x18] sm:$0xff] %v1801
        %p1806 = scmp.eq.s32.totalorder %s36, 1
        // Predicated region
        $region89: #{tpu_custom_call.1} parent=51 // pred_check
          %p1807 = pneg %p1806
        $region90: #{tpu_custom_call.1} parent=51 // pred_check_branch
          %1809 = sbr.rel (%p1807) target = $region92
        $region91: #{tpu_custom_call.1} parent=51 // pred_region
          %v1810 = vld [vmem:[#allocation3] sm:$0xff]
          %v1811 = vld [vmem:[#allocation3 + $0x8] sm:$0xff]
          %v1812 = vld [vmem:[#allocation3 + $0x10] sm:$0xff]
          %v1813 = vld [vmem:[#allocation3 + $0x18] sm:$0xff]
          %v1814 = vpack.c.bf16 %v1811, %v1810
          %v1815 = vpack.c.bf16 %v1813, %v1812
          %v1816 = vld [vmem:[#allocation2] sm:$0xff]
          %v1817 = vld [vmem:[#allocation2 + $0x8] sm:$0xff]
          %v1818 = vld [vmem:[#allocation2 + $0x10] sm:$0xff]
          %v1819 = vld [vmem:[#allocation2 + $0x18] sm:$0xff]
          %v1820 = vld [vmem:[#allocation17] sm:$0xf]
          %v1821 = vld [vmem:[#allocation17 + $0x4] sm:$0xf]
          %v1822 = vld [vmem:[#allocation17 + $0x8] sm:$0xf]
          %v1823 = vld [vmem:[#allocation17 + $0xc] sm:$0xf]
          %v1824 = vld [vmem:[#allocation17 + $0x10] sm:$0xf]
          %v1825 = vld [vmem:[#allocation17 + $0x14] sm:$0xf]
          %v1826 = vld [vmem:[#allocation17 + $0x18] sm:$0xf]
          %v1827 = vld [vmem:[#allocation17 + $0x1c] sm:$0xf]
          %v1828 = vld [vmem:[#allocation17 + $0x20] sm:$0xf]
          %v1829 = vld [vmem:[#allocation17 + $0x24] sm:$0xf]
          %v1830 = vld [vmem:[#allocation17 + $0x28] sm:$0xf]
          %v1831 = vld [vmem:[#allocation17 + $0x2c] sm:$0xf]
          %v1832 = vld [vmem:[#allocation17 + $0x30] sm:$0xf]
          %v1833 = vld [vmem:[#allocation17 + $0x34] sm:$0xf]
          %v1834 = vld [vmem:[#allocation17 + $0x38] sm:$0xf]
          %v1835 = vld [vmem:[#allocation17 + $0x3c] sm:$0xf]
          %v1852 = vunpack.c.l.b16 %v1820
          %v1853 = vunpack.c.l.b16 %v1821
          %v1854 = vunpack.c.l.b16 %v1822
          %v1855 = vunpack.c.l.b16 %v1823
          %v1856 = vunpack.c.l.b16 %v1824
          %v1857 = vunpack.c.l.b16 %v1825
          %v1858 = vunpack.c.l.b16 %v1826
          %v1859 = vunpack.c.l.b16 %v1827
          %v1860 = vunpack.c.l.b16 %v1828
          %v1861 = vunpack.c.l.b16 %v1829
          %v1862 = vunpack.c.l.b16 %v1830
          %v1863 = vunpack.c.l.b16 %v1831
          %v1864 = vunpack.c.l.b16 %v1832
          %v1865 = vunpack.c.l.b16 %v1833
          %v1866 = vunpack.c.l.b16 %v1834
          %v1867 = vunpack.c.l.b16 %v1835
          %v1868 = vpack.c.b16 %v1853, %v1852
          %v1869 = vpack.c.b16 %v1855, %v1854
          %v1870 = vpack.c.b16 %v1857, %v1856
          %v1871 = vpack.c.b16 %v1859, %v1858
          %v1872 = vpack.c.b16 %v1861, %v1860
          %v1873 = vpack.c.b16 %v1863, %v1862
          %v1874 = vpack.c.b16 %v1865, %v1864
          %v1875 = vpack.c.b16 %v1867, %v1866
          %1884 = vmatprep.subr.bf16.mxu0 0
          %1885 = vmatpush1.bf16.msra.mxu0 %v1868
          %1886 = vmatprep.subr.bf16.mxu0 0
          %1887 = vmatpush1.bf16.msra.mxu0 %v1869
          %1888 = vmatprep.subr.bf16.mxu0 0
          %1889 = vmatpush1.bf16.msra.mxu0 %v1870
          %1890 = vmatprep.subr.bf16.mxu0 0
          %1891 = vmatpush1.bf16.msra.mxu0 %v1871
          %1892 = vmatprep.subr.bf16.mxu0 0
          %1893 = vmatpush1.bf16.msra.mxu0 %v1872
          %1894 = vmatprep.subr.bf16.mxu0 0
          %1895 = vmatpush1.bf16.msra.mxu0 %v1873
          %1896 = vmatprep.subr.bf16.mxu0 0
          %1897 = vmatpush1.bf16.msra.mxu0 %v1874
          %1898 = vmatprep.subr.bf16.mxu0 0
          %1899 = vmatpush1.bf16.msra.mxu0 %v1875
          %1900 = vmatprep.subr.bf16.mxu0 0
          %1901 = vmatpush1.bf16.msra.mxu0 0
          %1902 = vmatprep.subr.bf16.mxu0 0
          %1903 = vmatpush1.bf16.msra.mxu0 0
          %1904 = vmatprep.subr.bf16.mxu0 0
          %1905 = vmatpush1.bf16.msra.mxu0 0
          %1906 = vmatprep.subr.bf16.mxu0 0
          %1907 = vmatpush1.bf16.msra.mxu0 0
          %1908 = vmatprep.subr.bf16.mxu0 0
          %1909 = vmatpush1.bf16.msra.mxu0 0
          %1910 = vmatprep.subr.bf16.mxu0 0
          %1911 = vmatpush1.bf16.msra.mxu0 0
          %1912 = vmatprep.subr.bf16.mxu0 0
          %1913 = vmatpush1.bf16.msra.mxu0 0
          %1914 = vmatprep.subr.bf16.mxu0 0
          %1915 = vmatpush1.bf16.msra.mxu0 0
          %1916 = vmatprep.mubr.bf16.mxu0 0
          %1917 = vmatmul.mubr.bf16.gmra.mrb[0].mxu0 %v1814
          %v1918 = vpop.f32.mrb[0].mxu0
          %v1919 = vadd.f32 0.0, %v1918
          %v1920 = vpop.f32.mrb[0].mxu0
          %v1921 = vpop.f32.mrb[0].mxu0
          %v1922 = vadd.f32 0.0, %v1921
          %v1923 = vpop.f32.mrb[0].mxu0
          %1924 = vmatprep.mubr.bf16.mxu0 0
          %1925 = vmatmul.mubr.bf16.gmra.mrb[0].mxu0 %v1815
          %v1926 = vpop.f32.mrb[0].mxu0
          %v1927 = vadd.f32 0.0, %v1926
          %v1928 = vpop.f32.mrb[0].mxu0
          %v1929 = vpop.f32.mrb[0].mxu0
          %v1930 = vadd.f32 0.0, %v1929
          %v1931 = vpop.f32.mrb[0].mxu0
          %1932 = vdwg.mxu0
          %v1933 = vadd.f32 %v1816, %v1919
          %v1934 = vadd.f32 %v1817, %v1922
          %v1935 = vadd.f32 %v1818, %v1927
          %v1936 = vadd.f32 %v1819, %v1930
          %v1937 = vpack.c.bf16 %v1934, %v1933
          %v1938 = vpack.c.bf16 %v1936, %v1935
          %v1941 = vunpack.c.l.b16 %v1937
          %v1942 = vunpack.c.h.b16 %v1937
          %v1943 = vunpack.c.l.b16 %v1938
          %v1944 = vunpack.c.h.b16 %v1938
          %v1945 = vpack.c.b16 %v1941, %v1941
          %v1946 = vpack.c.b16 %v1942, %v1942
          %v1947 = vpack.c.b16 %v1943, %v1943
          %v1948 = vpack.c.b16 %v1944, %v1944
          %1953 = vst [vmem:[#allocation19] sm:$0xf] %v1945
          %1954 = vst [vmem:[#allocation19 + $0x4] sm:$0xf] %v1946
          %1955 = vst [vmem:[#allocation19 + $0x8] sm:$0xf] %v1947
          %1956 = vst [vmem:[#allocation19 + $0xc] sm:$0xf] %v1948
        $region92: #{tpu_custom_call.1} parent=51 // pred_fallthru
          _
        // Predicated region
        $region93: #{tpu_custom_call.1} parent=51 // pred_check
          %p1957 = pneg %p259
        $region94: #{tpu_custom_call.1} parent=51 // pred_check_branch
          %1959 = sbr.rel (%p1957) target = $region96
        $region95: #{tpu_custom_call.1} parent=51 // pred_region
          %s1960 = smul.u32 4, %s35
          %s1962 = ssub.s32 256, 256
          %1963 = vsyncadd [#allocation7], %s1962
          %s1964 = smul.addr %s1960, 64
          %s1965 = scalar_lea.hbm %s8, %s1964
          %s1966 = sshll.u32 [#allocation19], 4
          %s1967 = int_to_ptr.vmem [resolvable:$true] %s1966
          %1972 = dma.vmem_to_hbm [thread:$0]  %s1967, 256, %s1965, [#allocation7], 64, 64, 4
        $region96: #{tpu_custom_call.1} parent=51 // pred_fallthru
          _
        // Predicated region
        $region97: #{tpu_custom_call.1} parent=51 // pred_check
          %p1973 = pneg %p259
        $region98: #{tpu_custom_call.1} parent=51 // pred_check_branch
          %1975 = sbr.rel (%p1973) target = $region100
        $region99: #{tpu_custom_call.1} parent=51 // pred_region
          %1976 = dma.done [#allocation7], 256
        $region100: #{tpu_custom_call.1} parent=51 // pred_fallthru
          _
      $region52: #{tpu_custom_call.1} parent=5 // pred_fallthru
        _
      %p1977 = scmp.le.s32.totalorder 2, %s26
      // Predicated region
      $region101: #{tpu_custom_call.1} parent=5 // pred_check
        %p1978 = pneg %p1977
      $region102: #{tpu_custom_call.1} parent=5 // pred_check_branch
        %1980 = sbr.rel (%p1978) target = $region104
      $region103: #{tpu_custom_call.1} parent=5 // pred_region
        %s1981 = ssub.s32 %s26, 2
      $region104: #{tpu_custom_call.1} parent=5 // pred_fallthru
        _
    $region6: #{tpu_custom_call.1} parent=1 // loop_footer
      %s30 = sadd.s32 1, %s26
    $region7: #{tpu_custom_call.1} parent=1 // loop_footer_branch
      %25 = sbr.rel target = $region3
    $region8: #{tpu_custom_call.1} parent=1 // loop_exit
      _
    %1982 = vsyncpa [#allocation6], 1
    %s1983 = scalar_lea.sflag [#allocation6], 1
    %1984 = vsyncpa %s1983, 1
    %1985 = vsyncpa [#allocation9], 1
    %s1986 = scalar_lea.sflag [#allocation9], 1
    %1987 = vsyncpa %s1986, 1
    %1988 = vsyncpa [#allocation12], 1
    %s1989 = scalar_lea.sflag [#allocation12], 1
    %1990 = vsyncpa %s1989, 1
    %1991 = vsyncpa [#allocation15], 1
    %s1992 = scalar_lea.sflag [#allocation15], 1
    %1993 = vsyncpa %s1992, 1
    %1994 = vsyncpa [#allocation18], 1
    %1995 = vsyncpa [#allocation7], 1
    %s1996 = scalar_lea.sflag [#allocation7], 1
    %1997 = vsyncpa %s1996, 1

</llo_original>
